<compile_context>
chip_gen: v7x
topology: tpu7x:2x2x1
jax: 0.10.0
libtpu: 0.0.40
codegen_flags: <defaults>
</compile_context>

<pallas_src>
import jax
import jax.numpy as jnp
from jax.experimental import pallas as pl
from jax.experimental.pallas import tpu as pltpu


def _row_tile(n, cap):
    """Largest divisor of n that is <= cap and is either a multiple of 8 or n
    itself, so a lane-merged (TH, lanes) output block is layout-legal."""
    for t in range(min(n, cap), 0, -1):
        if n % t == 0 and (t % 8 == 0 or t == n):
            return t
    return n


_COMPILER_PARAMS = pltpu.CompilerParams(
    dimension_semantics=("parallel", "parallel"),
    # Tiles here are small; limit chosen to be safe on every generation
    # (v7x has only 64 MiB VMEM per TensorCore).
    vmem_limit_bytes=32 * 1024 * 1024,
)


# ----------------------------------------------------------------------------
# In-kernel helpers.
# ----------------------------------------------------------------------------
def _conv3x3_bn_relu_tile(xp_ref, w3_ref, b3_ref, TH, W):
    """3x3 conv (input already zero-padded) + folded-BN bias + ReLU for one
    row tile. Single im2col MXU matmul. Returns bf16 (TH*W, Cmid)."""
    Cin = xp_ref.shape[3]
    row0 = pl.multiple_of(pl.program_id(1) * TH, TH)
    xt = xp_ref[0, pl.ds(row0, TH + 2), :, :]              # (TH+2, W+2, Cin)
    cols = []
    for dy in range(3):
        for dx in range(3):
            cols.append(xt[dy:dy + TH, dx:dx + W, :].reshape(TH * W, Cin))
    patches = jnp.concatenate(cols, axis=-1)               # (TH*W, 9*Cin)
    acc = jnp.dot(patches, w3_ref[...], preferred_element_type=jnp.float32)
    h = jnp.maximum(acc + b3_ref[...], 0.0)
    return h.astype(jnp.bfloat16)


def _w_upsample(z3, aw):
    """Bilinear interpolation along W: (TH, W, C) x (W2, W) -> (TH, W2, C)."""
    TH, W, _ = z3.shape
    W2 = aw.shape[0]
    aw_b = jnp.broadcast_to(aw[None, :, :], (TH, W2, W))
    return jnp.einsum("hvw,hwc->hvc", aw_b, z3,
                      preferred_element_type=jnp.float32)


# ----------------------------------------------------------------------------
# Kernel bodies.
# ----------------------------------------------------------------------------
def _fused3_conv1_wup_kernel(xp_ref, w3_ref, b3_ref, w1_ref, aw_ref, o_ref):
    # not-last & scale>1: conv3x3+bn+relu -> conv1x1(folded) -> W-upsample.
    TH = o_ref.shape[1]
    W = xp_ref.shape[2] - 2
    Cout = w1_ref.shape[1]
    W2 = aw_ref.shape[0]
    h = _conv3x3_bn_relu_tile(xp_ref, w3_ref, b3_ref, TH, W)      # (TH*W, Cmid)
    z = jnp.dot(h, w1_ref[...], preferred_element_type=jnp.float32)
    t = _w_upsample(z.reshape(TH, W, Cout), aw_ref[...])          # (TH, W2, Cout)
    o_ref[0] = t.reshape(TH, W2 * Cout).astype(o_ref.dtype)


def _fused3_conv1_bias_relu_kernel(xp_ref, w3_ref, b3_ref, w1_ref, b1_ref, o_ref):
    # not-last & scale==1: conv3x3+bn+relu -> conv1x1 + bias + relu.
    TH = o_ref.shape[1]
    W = xp_ref.shape[2] - 2
    Cout = w1_ref.shape[1]
    h = _conv3x3_bn_relu_tile(xp_ref, w3_ref, b3_ref, TH, W)
    z = jnp.dot(h, w1_ref[...], preferred_element_type=jnp.float32)
    y = jnp.maximum(z + b1_ref[...], 0.0)
    o_ref[0] = y.reshape(TH, W * Cout).astype(o_ref.dtype)


def _conv1x1_wup_kernel(x_ref, w1_ref, aw_ref, o_ref):
    # last & scale>1: conv1x1(folded) at low res + W-upsample.
    TH, W, Cin = x_ref.shape[1], x_ref.shape[2], x_ref.shape[3]
    Cout = w1_ref.shape[1]
    W2 = aw_ref.shape[0]
    z = jnp.dot(x_ref[0].reshape(TH * W, Cin), w1_ref[...],
                preferred_element_type=jnp.float32)
    t = _w_upsample(z.reshape(TH, W, Cout), aw_ref[...])
    o_ref[0] = t.reshape(TH, W2 * Cout).astype(o_ref.dtype)


def _conv1x1_bias_relu_kernel(x_ref, w1_ref, b1_ref, o_ref):
    # last & scale==1: conv1x1 + bias + relu.
    TH, W, Cin = x_ref.shape[1], x_ref.shape[2], x_ref.shape[3]
    Cout = w1_ref.shape[1]
    z = jnp.dot(x_ref[0].reshape(TH * W, Cin), w1_ref[...],
                preferred_element_type=jnp.float32)
    y = jnp.maximum(z + b1_ref[...], 0.0)
    o_ref[0] = y.reshape(TH, W * Cout).astype(o_ref.dtype)


def _hup_bias_relu_kernel(t_ref, ah_ref, b_ref, o_ref):
    # H-direction bilinear interpolation (2D matmul) + BN bias + ReLU,
    # lane-dense (TU, W2*Cout) output tile.
    y = jnp.dot(ah_ref[...], t_ref[0], preferred_element_type=jnp.float32)
    o_ref[0] = jnp.maximum(y + b_ref[...], 0.0).astype(o_ref.dtype)


# ----------------------------------------------------------------------------
# pallas_call wrappers.
# ----------------------------------------------------------------------------
def fused_conv3_conv1_wupsample(x_nhwc, w3f, b3r, w1f, aw):
    N, H, W, Cin = x_nhwc.shape
    Cmid = w3f.shape[1]
    Cout = w1f.shape[1]
    W2 = aw.shape[0]
    TH = _row_tile(H, 8)
    xp = jnp.pad(x_nhwc, ((0, 0), (1, 1), (1, 1), (0, 0)))  # pad once, bf16
    return pl.pallas_call(
        _fused3_conv1_wup_kernel,
        out_shape=jax.ShapeDtypeStruct((N, H, W2 * Cout), jnp.float32),
        grid_spec=pltpu.PrefetchScalarGridSpec(
            num_scalar_prefetch=0,
            grid=(N, H // TH),
            in_specs=[
                pl.BlockSpec((1, H + 2, W + 2, Cin), lambda n, i: (n, 0, 0, 0)),
                pl.BlockSpec((9 * Cin, Cmid), lambda n, i: (0, 0)),
                pl.BlockSpec((1, Cmid), lambda n, i: (0, 0)),
                pl.BlockSpec((Cmid, Cout), lambda n, i: (0, 0)),
                pl.BlockSpec((W2, W), lambda n, i: (0, 0)),
            ],
            out_specs=pl.BlockSpec((1, TH, W2 * Cout), lambda n, i: (n, i, 0)),
        ),
        compiler_params=_COMPILER_PARAMS,
    )(xp, w3f, b3r, w1f, aw)


def fused_conv3_conv1_bias_relu(x_nhwc, w3f, b3r, w1f, b1r):
    N, H, W, Cin = x_nhwc.shape
    Cmid = w3f.shape[1]
    Cout = w1f.shape[1]
    TH = _row_tile(H, 8)
    xp = jnp.pad(x_nhwc, ((0, 0), (1, 1), (1, 1), (0, 0)))
    return pl.pallas_call(
        _fused3_conv1_bias_relu_kernel,
        out_shape=jax.ShapeDtypeStruct((N, H, W * Cout), jnp.float32),
        grid_spec=pltpu.PrefetchScalarGridSpec(
            num_scalar_prefetch=0,
            grid=(N, H // TH),
            in_specs=[
                pl.BlockSpec((1, H + 2, W + 2, Cin), lambda n, i: (n, 0, 0, 0)),
                pl.BlockSpec((9 * Cin, Cmid), lambda n, i: (0, 0)),
                pl.BlockSpec((1, Cmid), lambda n, i: (0, 0)),
                pl.BlockSpec((Cmid, Cout), lambda n, i: (0, 0)),
                pl.BlockSpec((1, Cout), lambda n, i: (0, 0)),
            ],
            out_specs=pl.BlockSpec((1, TH, W * Cout), lambda n, i: (n, i, 0)),
        ),
        compiler_params=_COMPILER_PARAMS,
    )(xp, w3f, b3r, w1f, b1r)


def conv1x1_wupsample(x_nhwc, w1f, aw):
    N, H, W, Cin = x_nhwc.shape
    Cout = w1f.shape[1]
    W2 = aw.shape[0]
    TH = _row_tile(H, 8)
    return pl.pallas_call(
        _conv1x1_wup_kernel,
        out_shape=jax.ShapeDtypeStruct((N, H, W2 * Cout), jnp.float32),
        grid_spec=pltpu.PrefetchScalarGridSpec(
            num_scalar_prefetch=0,
            grid=(N, H // TH),
            in_specs=[
                pl.BlockSpec((1, TH, W, Cin), lambda n, i: (n, i, 0, 0)),
                pl.BlockSpec((Cin, Cout), lambda n, i: (0, 0)),
                pl.BlockSpec((W2, W), lambda n, i: (0, 0)),
            ],
            out_specs=pl.BlockSpec((1, TH, W2 * Cout), lambda n, i: (n, i, 0)),
        ),
        compiler_params=_COMPILER_PARAMS,
    )(x_nhwc, w1f, aw)


def conv1x1_bias_relu(x_nhwc, w1f, b1r):
    N, H, W, Cin = x_nhwc.shape
    Cout = w1f.shape[1]
    TH = _row_tile(H, 8)
    return pl.pallas_call(
        _conv1x1_bias_relu_kernel,
        out_shape=jax.ShapeDtypeStruct((N, H, W * Cout), jnp.float32),
        grid_spec=pltpu.PrefetchScalarGridSpec(
            num_scalar_prefetch=0,
            grid=(N, H // TH),
            in_specs=[
                pl.BlockSpec((1, TH, W, Cin), lambda n, i: (n, i, 0, 0)),
                pl.BlockSpec((Cin, Cout), lambda n, i: (0, 0)),
                pl.BlockSpec((1, Cout), lambda n, i: (0, 0)),
            ],
            out_specs=pl.BlockSpec((1, TH, W * Cout), lambda n, i: (n, i, 0)),
        ),
        compiler_params=_COMPILER_PARAMS,
    )(x_nhwc, w1f, b1r)


def hupsample_bias_relu(t, ah, bias_wide):
    # t: (N, H, W2*Cout) lane-merged low(H)-res image; ah: (H2, H).
    N, H, WC = t.shape
    H2 = ah.shape[0]
    TU = _row_tile(H2, 32)
    return pl.pallas_call(
        _hup_bias_relu_kernel,
        out_shape=jax.ShapeDtypeStruct((N, H2, WC), jnp.float32),
        grid_spec=pltpu.PrefetchScalarGridSpec(
            num_scalar_prefetch=0,
            grid=(N, H2 // TU),
            in_specs=[
                pl.BlockSpec((1, H, WC), lambda n, u: (n, 0, 0)),
                pl.BlockSpec((TU, H), lambda n, u: (u, 0)),
                pl.BlockSpec((1, WC), lambda n, u: (0, 0)),
            ],
            out_specs=pl.BlockSpec((1, TU, WC), lambda n, u: (n, u, 0)),
        ),
        compiler_params=_COMPILER_PARAMS,
    )(t, ah, bias_wide)


# ----------------------------------------------------------------------------
# Glue: bilinear matrices, BN folding, parameter init, forward wrapper.
# ----------------------------------------------------------------------------
def _bilinear_matrix(n_in, n_out):
    # align_corners=True: src = i * (n_in - 1) / (n_out - 1); rows sum to 1.
    i = jnp.arange(n_out, dtype=jnp.float32)
    if n_out == 1:
        src = jnp.zeros((n_out,), jnp.float32)
    else:
        src = i * (n_in - 1) / (n_out - 1)
    lo = jnp.clip(jnp.floor(src).astype(jnp.int32), 0, n_in - 1)
    hi = jnp.clip(lo + 1, 0, n_in - 1)
    frac = src - lo.astype(jnp.float32)
    A = jnp.zeros((n_out, n_in), jnp.float32)
    A = A.at[jnp.arange(n_out), lo].add(1.0 - frac)
    A = A.at[jnp.arange(n_out), hi].add(frac)
    return A


def _fold_bn(gamma, beta, mean, var, eps=1e-5):
    s = gamma / jnp.sqrt(var + eps)
    b = beta - mean * s
    return s, b


def _kaiming_uniform_hwio(key, cout, cin, kh, kw):
    # matches nn.init.kaiming_uniform_ defaults: bound = sqrt(6 / fan_in)
    fan_in = cin * kh * kw
    bound = (6.0 / fan_in) ** 0.5
    return jax.random.uniform(key, (kh, kw, cin, cout), jnp.float32,
                              minval=-bound, maxval=bound)


def init_decoder_block_params(key, in_planes, out_planes):
    k = jax.random.split(key, 4)
    w3 = _kaiming_uniform_hwio(k[0], in_planes, in_planes, 3, 3)   # (3,3,Cin,Cin)
    g3 = 1.0 + 0.02 * jax.random.normal(k[1], (in_planes,), jnp.float32)
    bn3 = (g3, jnp.zeros((in_planes,)), jnp.zeros((in_planes,)), jnp.ones((in_planes,)))
    w1 = _kaiming_uniform_hwio(k[2], out_planes, in_planes, 1, 1)
    w1 = w1.reshape(in_planes, out_planes)                         # (Cin, Cout)
    g1 = 1.0 + 0.02 * jax.random.normal(k[3], (out_planes,), jnp.float32)
    bn1 = (g1, jnp.zeros((out_planes,)), jnp.zeros((out_planes,)), jnp.ones((out_planes,)))
    return {"w3": w3, "bn3": bn3, "w1": w1, "bn1": bn1}


def decoder_block_forward(x_nchw, params, scale=2, last=False):
    x = jnp.transpose(x_nchw, (0, 2, 3, 1)).astype(jnp.bfloat16)   # NCHW -> NHWC, bf16
    N, H, W, _ = x.shape
    s1, b1 = _fold_bn(*params["bn1"])
    w1f = (params["w1"] * s1).astype(jnp.bfloat16)
    Cout = w1f.shape[1]
    if not last:
        s3, b3 = _fold_bn(*params["bn3"])
        w3f = (params["w3"] * s3).reshape(-1, params["w3"].shape[-1]).astype(jnp.bfloat16)
        b3r = b3.reshape(1, -1).astype(jnp.float32)
    if scale > 1:
        H2, W2 = H * scale, W * scale
        Aw = _bilinear_matrix(W, W2)
        Ah = _bilinear_matrix(H, H2)
        if not last:
            t = fused_conv3_conv1_wupsample(x, w3f, b3r, w1f, Aw)   # (N, H, W2*Cout)
        else:
            t = conv1x1_wupsample(x, w1f, Aw)
        # lane-merged index v*Cout + c -> bias[c]
        bias_wide = jnp.tile(b1.reshape(1, -1).astype(jnp.float32), (1, W2))
        y = hupsample_bias_relu(t, Ah, bias_wide)                   # (N, H2, W2*Cout)
        y = y.reshape(N, H2, W2, Cout)
    else:
        b1r = b1.reshape(1, -1).astype(jnp.float32)
        if not last:
            y = fused_conv3_conv1_bias_relu(x, w3f, b3r, w1f, b1r)  # (N, H, W*Cout)
        else:
            y = conv1x1_bias_relu(x, w1f, b1r)
        y = y.reshape(N, H, W, Cout)
    return jnp.transpose(y, (0, 3, 1, 2))                          # NHWC -> NCHW


# ----------------------------------------------------------------------------
# Pure-JAX f32 reference (for correctness check only).
# ----------------------------------------------------------------------------
def reference_forward(x_nchw, params, scale=2, last=False):
    x = jnp.transpose(x_nchw, (0, 2, 3, 1))
    if not last:
        s3, b3 = _fold_bn(*params["bn3"])
        y = jax.lax.conv_general_dilated(
            x, params["w3"], (1, 1), "SAME",
            dimension_numbers=("NHWC", "HWIO", "NHWC"))
        x = jnp.maximum(y * s3 + b3, 0.0)
    N, H, W, _ = x.shape
    if scale > 1:
        Ah = _bilinear_matrix(H, H * scale)
        Aw = _bilinear_matrix(W, W * scale)
        x = jnp.einsum("uh,vw,nhwc->nuvc", Ah, Aw, x)
    s1, b1 = _fold_bn(*params["bn1"])
    y = jnp.einsum("nhwc,cd->nhwd", x, params["w1"])
    y = jnp.maximum(y * s1 + b1, 0.0)
    return jnp.transpose(y, (0, 3, 1, 2))


def _max_rel_err(a, b):
    denom = float(jnp.max(jnp.abs(b))) + 1e-6
    return float(jnp.max(jnp.abs(a.astype(jnp.float32) - b))) / denom


def _check(out, ref, tag):
    assert out.shape == ref.shape, (tag, out.shape, ref.shape)
    assert bool(jnp.all(jnp.isfinite(out))), tag
    assert bool(jnp.all(out >= 0.0)), tag          # final ReLU
    err = _max_rel_err(out, ref)
    assert err < 0.08, f"{tag}: mismatch vs reference: {err}"


if __name__ == "__main__":
    N, in_planes, H, W = 2, 4, 16, 16
    out_planes, scale = 8, 2

    key = jax.random.PRNGKey(0)
    kx, kp = jax.random.split(key)
    x = jax.random.normal(kx, (N, in_planes, H, W), jnp.float32)
    params = init_decoder_block_params(kp, in_planes, out_planes)

    # Main path: conv3x3+BN+ReLU -> bilinear x2 -> conv1x1+BN+ReLU.
    out = jax.block_until_ready(decoder_block_forward(x, params, scale=scale, last=False))
    assert out.shape == (N, out_planes, H * scale, W * scale), out.shape
    _check(out, reference_forward(x, params, scale=scale, last=False), "main")

    # last=True, scale=1: just the 1x1 ConvBnRelu.
    out2 = jax.block_until_ready(decoder_block_forward(x, params, scale=1, last=True))
    _check(out2, reference_forward(x, params, scale=1, last=True), "last/scale1")

    # last=True, scale=2: upsample then 1x1 ConvBnRelu.
    out3 = jax.block_until_ready(decoder_block_forward(x, params, scale=2, last=True))
    _check(out3, reference_forward(x, params, scale=2, last=True), "last/scale2")

    # last=False, scale=1: conv3x3 then 1x1, no upsample.
    out4 = jax.block_until_ready(decoder_block_forward(x, params, scale=1, last=False))
    _check(out4, reference_forward(x, params, scale=1, last=False), "notlast/scale1")

    print("KERNEL_OK")
</pallas_src>

<mosaic_0001>
module attributes {stable_mosaic.version = 11 : i64} {
  func.func @_fused3_conv1_wup_kernel(%arg0: i32, %arg1: i32, %arg2: memref<1x18x18x4xbf16, #tpu.memory_space<vmem>>, %arg3: memref<36x4xbf16, #tpu.memory_space<vmem>>, %arg4: memref<1x4xf32, #tpu.memory_space<vmem>>, %arg5: memref<4x8xbf16, #tpu.memory_space<vmem>>, %arg6: memref<32x16xf32, #tpu.memory_space<vmem>>, %arg7: memref<1x8x256xf32, #tpu.memory_space<vmem>>) attributes {dimension_semantics = [#tpu.dimension_semantics<parallel>, #tpu.dimension_semantics<parallel>], iteration_bounds = array<i64: 2, 2>, scalar_prefetch = 0 : i64, scratch_operands = 0 : i64, tpu.core_type = #tpu.core_type<tc>, window_params = [{transform_indices = @transform_0, window_bounds = array<i64: 1, 18, 18, 4>}, {pipeline_mode = #tpu.pipeline_mode<synchronous>, transform_indices = @transform_1, window_bounds = array<i64: 36, 4>}, {pipeline_mode = #tpu.pipeline_mode<synchronous>, transform_indices = @transform_2, window_bounds = array<i64: 1, 4>}, {pipeline_mode = #tpu.pipeline_mode<synchronous>, transform_indices = @transform_3, window_bounds = array<i64: 4, 8>}, {pipeline_mode = #tpu.pipeline_mode<synchronous>, transform_indices = @transform_4, window_bounds = array<i64: 32, 16>}, {transform_indices = @transform_5, window_bounds = array<i64: 1, 8, 256>}]} {
    %c8_i32 = arith.constant 8 : i32
    %0 = arith.muli %arg1, %c8_i32 : i32
    %1 = tpu.assume_multiple %0, 8 : i32
    %c0 = arith.constant 0 : index
    %2 = arith.index_cast %1 : i32 to index
    %c0_0 = arith.constant 0 : index
    %c0_1 = arith.constant 0 : index
    %3 = vector.load %arg2[%c0, %2, %c0_0, %c0_1] : memref<1x18x18x4xbf16, #tpu.memory_space<vmem>>, vector<1x10x18x4xbf16>
    %4 = vector.shape_cast %3 : vector<1x10x18x4xbf16> to vector<10x18x4xbf16>
    %5 = vector.extract_strided_slice %4 {offsets = [0, 0, 0], sizes = [8, 16, 4], strides = [1, 1, 1]} : vector<10x18x4xbf16> to vector<8x16x4xbf16>
    %6 = vector.shape_cast %5 : vector<8x16x4xbf16> to vector<128x4xbf16>
    %7 = vector.extract_strided_slice %4 {offsets = [0, 1, 0], sizes = [8, 16, 4], strides = [1, 1, 1]} : vector<10x18x4xbf16> to vector<8x16x4xbf16>
    %8 = vector.shape_cast %7 : vector<8x16x4xbf16> to vector<128x4xbf16>
    %9 = vector.extract_strided_slice %4 {offsets = [0, 2, 0], sizes = [8, 16, 4], strides = [1, 1, 1]} : vector<10x18x4xbf16> to vector<8x16x4xbf16>
    %10 = vector.shape_cast %9 : vector<8x16x4xbf16> to vector<128x4xbf16>
    %11 = vector.extract_strided_slice %4 {offsets = [1, 0, 0], sizes = [8, 16, 4], strides = [1, 1, 1]} : vector<10x18x4xbf16> to vector<8x16x4xbf16>
    %12 = vector.shape_cast %11 : vector<8x16x4xbf16> to vector<128x4xbf16>
    %13 = vector.extract_strided_slice %4 {offsets = [1, 1, 0], sizes = [8, 16, 4], strides = [1, 1, 1]} : vector<10x18x4xbf16> to vector<8x16x4xbf16>
    %14 = vector.shape_cast %13 : vector<8x16x4xbf16> to vector<128x4xbf16>
    %15 = vector.extract_strided_slice %4 {offsets = [1, 2, 0], sizes = [8, 16, 4], strides = [1, 1, 1]} : vector<10x18x4xbf16> to vector<8x16x4xbf16>
    %16 = vector.shape_cast %15 : vector<8x16x4xbf16> to vector<128x4xbf16>
    %17 = vector.extract_strided_slice %4 {offsets = [2, 0, 0], sizes = [8, 16, 4], strides = [1, 1, 1]} : vector<10x18x4xbf16> to vector<8x16x4xbf16>
    %18 = vector.shape_cast %17 : vector<8x16x4xbf16> to vector<128x4xbf16>
    %19 = vector.extract_strided_slice %4 {offsets = [2, 1, 0], sizes = [8, 16, 4], strides = [1, 1, 1]} : vector<10x18x4xbf16> to vector<8x16x4xbf16>
    %20 = vector.shape_cast %19 : vector<8x16x4xbf16> to vector<128x4xbf16>
    %21 = vector.extract_strided_slice %4 {offsets = [2, 2, 0], sizes = [8, 16, 4], strides = [1, 1, 1]} : vector<10x18x4xbf16> to vector<8x16x4xbf16>
    %22 = vector.shape_cast %21 : vector<8x16x4xbf16> to vector<128x4xbf16>
    %23 = tpu.concatenate %6, %8, %10, %12, %14, %16, %18, %20, %22 in 1 : vector<128x4xbf16>, vector<128x4xbf16>, vector<128x4xbf16>, vector<128x4xbf16>, vector<128x4xbf16>, vector<128x4xbf16>, vector<128x4xbf16>, vector<128x4xbf16>, vector<128x4xbf16> -> vector<128x36xbf16>
    %c0_2 = arith.constant 0 : index
    %c0_3 = arith.constant 0 : index
    %24 = vector.load %arg3[%c0_2, %c0_3] : memref<36x4xbf16, #tpu.memory_space<vmem>>, vector<36x4xbf16>
    %cst = arith.constant dense<0.000000e+00> : vector<128x4xf32>
    %25 = tpu.matmul %23, %24, %cst {dimension_numbers = #tpu.dot_dimension_numbers<[1], [0], [0], [1], [0, 0, 1, 1], [], []>} : vector<128x36xbf16>, vector<36x4xbf16>, vector<128x4xf32> -> vector<128x4xf32>
    %c0_4 = arith.constant 0 : index
    %c0_5 = arith.constant 0 : index
    %26 = vector.load %arg4[%c0_4, %c0_5] : memref<1x4xf32, #tpu.memory_space<vmem>>, vector<1x4xf32>
    %27 = vector.broadcast %26 : vector<1x4xf32> to vector<128x4xf32>
    %28 = arith.addf %25, %27 : vector<128x4xf32>
    %cst_6 = arith.constant 0.000000e+00 : f32
    %29 = vector.broadcast %cst_6 : f32 to vector<128x4xf32>
    %30 = arith.maximumf %28, %29 : vector<128x4xf32>
    %31 = arith.truncf %30 : vector<128x4xf32> to vector<128x4xbf16>
    %c0_7 = arith.constant 0 : index
    %c0_8 = arith.constant 0 : index
    %32 = vector.load %arg5[%c0_7, %c0_8] : memref<4x8xbf16, #tpu.memory_space<vmem>>, vector<4x8xbf16>
    %cst_9 = arith.constant dense<0.000000e+00> : vector<128x8xf32>
    %33 = tpu.matmul %31, %32, %cst_9 {dimension_numbers = #tpu.dot_dimension_numbers<[1], [0], [0], [1], [0, 0, 1, 1], [], []>} : vector<128x4xbf16>, vector<4x8xbf16>, vector<128x8xf32> -> vector<128x8xf32>
    %34 = vector.shape_cast %33 : vector<128x8xf32> to vector<8x16x8xf32>
    %c0_10 = arith.constant 0 : index
    %c0_11 = arith.constant 0 : index
    %35 = vector.load %arg6[%c0_10, %c0_11] : memref<32x16xf32, #tpu.memory_space<vmem>>, vector<32x16xf32>
    %36 = vector.shape_cast %35 : vector<32x16xf32> to vector<1x32x16xf32>
    %37 = vector.shape_cast %36 : vector<1x32x16xf32> to vector<1x32x16xf32>
    %38 = vector.broadcast %37 : vector<1x32x16xf32> to vector<8x32x16xf32>
    "tpu.trace_start"() <{level = 10 : i32, message = "hvw,hwc->hvc"}> : () -> ()
    %cst_12 = arith.constant dense<0.000000e+00> : vector<8x32x8xf32>
    %39 = tpu.matmul %38, %34, %cst_12 {dimension_numbers = #tpu.dot_dimension_numbers<[2], [1], [1], [2], [0, 0, 0, 1, 1, 2], [0], [0]>} : vector<8x32x16xf32>, vector<8x16x8xf32>, vector<8x32x8xf32> -> vector<8x32x8xf32>
    "tpu.trace_stop"() : () -> ()
    %40 = vector.shape_cast %39 : vector<8x32x8xf32> to vector<8x256xf32>
    %c0_13 = arith.constant 0 : index
    %c0_14 = arith.constant 0 : index
    %c0_15 = arith.constant 0 : index
    %41 = vector.load %arg7[%c0_13, %c0_14, %c0_15] : memref<1x8x256xf32, #tpu.memory_space<vmem>>, vector<1x8x256xf32>
    %42 = vector.shape_cast %41 : vector<1x8x256xf32> to vector<8x256xf32>
    %43 = vector.shape_cast %40 : vector<8x256xf32> to vector<1x8x256xf32>
    tpu.vector_store %arg7[%c0_13, %c0_14, %c0_15], %43 {strides = array<i32>} : memref<1x8x256xf32, #tpu.memory_space<vmem>>, vector<1x8x256xf32>,
    return
  }
  func.func @transform_0(%arg0: i32, %arg1: i32) -> (i32, i32, i32, i32) {
    %c0_i32 = arith.constant 0 : i32
    %c0_i32_0 = arith.constant 0 : i32
    %c0_i32_1 = arith.constant 0 : i32
    %c0_i32_2 = arith.constant 0 : i32
    return %arg0, %c0_i32, %c0_i32_0, %c0_i32_1 : i32, i32, i32, i32
  }
  func.func @transform_1(%arg0: i32, %arg1: i32) -> (i32, i32) {
    %c0_i32 = arith.constant 0 : i32
    %c0_i32_0 = arith.constant 0 : i32
    %c0_i32_1 = arith.constant 0 : i32
    return %c0_i32, %c0_i32_0 : i32, i32
  }
  func.func @transform_2(%arg0: i32, %arg1: i32) -> (i32, i32) {
    %c0_i32 = arith.constant 0 : i32
    %c0_i32_0 = arith.constant 0 : i32
    %c0_i32_1 = arith.constant 0 : i32
    return %c0_i32, %c0_i32_0 : i32, i32
  }
  func.func @transform_3(%arg0: i32, %arg1: i32) -> (i32, i32) {
    %c0_i32 = arith.constant 0 : i32
    %c0_i32_0 = arith.constant 0 : i32
    %c0_i32_1 = arith.constant 0 : i32
    return %c0_i32, %c0_i32_0 : i32, i32
  }
  func.func @transform_4(%arg0: i32, %arg1: i32) -> (i32, i32) {
    %c0_i32 = arith.constant 0 : i32
    %c0_i32_0 = arith.constant 0 : i32
    %c0_i32_1 = arith.constant 0 : i32
    return %c0_i32, %c0_i32_0 : i32, i32
  }
  func.func @transform_5(%arg0: i32, %arg1: i32) -> (i32, i32, i32) {
    %c0_i32 = arith.constant 0 : i32
    %c0_i32_0 = arith.constant 0 : i32
    return %arg0, %arg1, %c0_i32 : i32, i32, i32
  }
}

</mosaic_0001>

<llo_original>
// kernel: tpu_custom_call.1
$region0: #{tpu_custom_call.1}
  #allocation0 [shape = 'u32[]', space=smem, size = 0x4, offset = 0x4, fixed_abs, tag = 'smem constant byte address 0x4 - core index']
  #allocation1 [shape = 'u32[144,128]{1,0:T(1,128)}', space=vmem, size = 0x12000, scoped, tag = 'internal scratch']
  %s0 = inlined_call_operand.vmem [shape: bf16[2,18,18,4], index: 0, kind: input, shape index: {}]
  %s1 = inlined_call_operand.vmem [shape: bf16[36,4], index: 1, kind: input, shape index: {}]
  %s2 = inlined_call_operand.vmem [shape: f32[1,4], index: 2, kind: input, shape index: {}]
  %s3 = inlined_call_operand.vmem [shape: bf16[4,8], index: 3, kind: input, shape index: {}]
  %s4 = inlined_call_operand.vmem [shape: f32[32,16], index: 4, kind: input, shape index: {}]
  %s5 = inlined_call_operand.hbm [shape: f32[2,16,256], index: 5, kind: output, shape index: {}]
  %s6 = sld [smem:[#allocation0]]
  $region53: #{tpu_custom_call.1} parent=0
    _
  %s8 = ssub.s32 1, %s6
  %s9 = scalar_select 0, %s8, %s6
  $region1: #{tpu_custom_call.1} parent=0
    #allocation2 [shape = 'u8[16384]{0}', space=vmem, size = 0x4000, scoped, tag = 'output window, operand 0']
    #allocation3 [shape = 's32[2]{0}', space=sflag, size = 0x8, scoped, tag = 'scoped memory for tpu_custom_call.1']
    %10 = vsyncpa [#allocation3], 0
    %s11 = scalar_lea.sflag [#allocation3], 1
    %12 = vsyncpa %s11, 0
    loop: start=0, step=1, limit=6
    $region2: #{tpu_custom_call.1} parent=1 // loop_pre_header
      _
    $region3: #{tpu_custom_call.1} parent=1 // loop_header
      %s14 = sphi 0, %s18
      %p15 = scmp.ge.s32.totalorder %s14, 6
      %s21 = sphi 0, %s33
      %s22 = sphi 0, %s29
      %s23 = sphi 0, %s21
      %s24 = sphi 0, %s22
      %s25 = sphi 0, %s23
      %s26 = sphi 0, %s24
      %s36 = sphi 0, %s38
      %s39 = sphi 0, %s36
      %s40 = sphi 0, %s39
      %s56 = sphi 0, %s40
      %s60 = sphi 0, %s60
      %s62 = sphi 0, %s60
      %s63 = sphi 0, %s62
      %s77 = sphi 0, %s63
      %s81 = sphi 0, %s81
      %s83 = sphi 0, %s81
      %s84 = sphi 0, %s83
      %s98 = sphi 0, %s84
      %s102 = sphi 0, %s102
      %s104 = sphi 0, %s102
      %s105 = sphi 0, %s104
      %s119 = sphi 0, %s105
      %s123 = sphi 0, %s123
      %s125 = sphi 0, %s123
      %s126 = sphi 0, %s125
      %s140 = sphi 0, %s126
      %s148 = sphi 0, %s150
      %s151 = sphi 0, %s148
      %s152 = sphi 0, %s151
      %s168 = sphi 0, %s152
    $region4: #{tpu_custom_call.1} parent=1 // loop_header_branch
      %17 = sbr.rel (%p15) target = $region8
    $region5: #{tpu_custom_call.1} parent=1 // loop_body
      %s19 = ssub.s32 %s14, 1
      %s20 = ssub.s32 %s14, 2
      %s27 = sadd.s32 1, %s22
      %p28 = scmp.ge.s32.totalorder %s27, 2
      %s29 = scalar_select %p28, 0, %s27
      %s30 = sadd.s32 1, %s21
      %s31 = scalar_select %p28, %s30, %s21
      %p32 = scmp.ge.s32.totalorder %s31, 2
      %s33 = scalar_select %p32, 0, %s31
      %s34 = ssub.s32 %s21, %s33
      %p35 = scmp.eq.s32.totalorder %s34, 0
      %s37 = sadd.s32 %s36, 1
      %s38 = scalar_select %p35, %s36, %s37
      %p41 = pneg %p35
      %p42 = scmp.eq.s32.totalorder %s14, 3
      %p43 = por %p41, %p42
      %p44 = scmp.ne.s32.totalorder %s36, %s39
      %p45 = scmp.eq.s32.totalorder %s14, 0
      %p46 = por %p44, %p45
      %p47 = scmp.ne.s32.totalorder %s36, %s39
      %p48 = scmp.eq.s32.totalorder %s19, 3
      %p49 = por %p47, %p48
      %p50 = scmp.ne.s32.totalorder %s39, %s40
      %p51 = scmp.eq.s32.totalorder %s19, 0
      %p52 = por %p50, %p51
      %p53 = scmp.ne.s32.totalorder %s39, %s40
      %p54 = scmp.eq.s32.totalorder %s20, 3
      %p55 = por %p53, %p54
      %p57 = scmp.ne.s32.totalorder %s40, %s56
      %p58 = scmp.eq.s32.totalorder %s20, 0
      %p59 = por %p57, %p58
      %s61 = sadd.s32 %s60, 1
      %p64 = scmp.eq.s32.totalorder %s14, 3
      %p65 = scmp.ne.s32.totalorder %s60, %s62
      %p66 = scmp.eq.s32.totalorder %s14, 0
      %p67 = por %p65, %p66
      %p68 = scmp.ne.s32.totalorder %s60, %s62
      %p69 = scmp.eq.s32.totalorder %s19, 3
      %p70 = por %p68, %p69
      %p71 = scmp.ne.s32.totalorder %s62, %s63
      %p72 = scmp.eq.s32.totalorder %s19, 0
      %p73 = por %p71, %p72
      %p74 = scmp.ne.s32.totalorder %s62, %s63
      %p75 = scmp.eq.s32.totalorder %s20, 3
      %p76 = por %p74, %p75
      %p78 = scmp.ne.s32.totalorder %s63, %s77
      %p79 = scmp.eq.s32.totalorder %s20, 0
      %p80 = por %p78, %p79
      %s82 = sadd.s32 %s81, 1
      %p85 = scmp.eq.s32.totalorder %s14, 3
      %p86 = scmp.ne.s32.totalorder %s81, %s83
      %p87 = scmp.eq.s32.totalorder %s14, 0
      %p88 = por %p86, %p87
      %p89 = scmp.ne.s32.totalorder %s81, %s83
      %p90 = scmp.eq.s32.totalorder %s19, 3
      %p91 = por %p89, %p90
      %p92 = scmp.ne.s32.totalorder %s83, %s84
      %p93 = scmp.eq.s32.totalorder %s19, 0
      %p94 = por %p92, %p93
      %p95 = scmp.ne.s32.totalorder %s83, %s84
      %p96 = scmp.eq.s32.totalorder %s20, 3
      %p97 = por %p95, %p96
      %p99 = scmp.ne.s32.totalorder %s84, %s98
      %p100 = scmp.eq.s32.totalorder %s20, 0
      %p101 = por %p99, %p100
      %s103 = sadd.s32 %s102, 1
      %p106 = scmp.eq.s32.totalorder %s14, 3
      %p107 = scmp.ne.s32.totalorder %s102, %s104
      %p108 = scmp.eq.s32.totalorder %s14, 0
      %p109 = por %p107, %p108
      %p110 = scmp.ne.s32.totalorder %s102, %s104
      %p111 = scmp.eq.s32.totalorder %s19, 3
      %p112 = por %p110, %p111
      %p113 = scmp.ne.s32.totalorder %s104, %s105
      %p114 = scmp.eq.s32.totalorder %s19, 0
      %p115 = por %p113, %p114
      %p116 = scmp.ne.s32.totalorder %s104, %s105
      %p117 = scmp.eq.s32.totalorder %s20, 3
      %p118 = por %p116, %p117
      %p120 = scmp.ne.s32.totalorder %s105, %s119
      %p121 = scmp.eq.s32.totalorder %s20, 0
      %p122 = por %p120, %p121
      %s124 = sadd.s32 %s123, 1
      %p127 = scmp.eq.s32.totalorder %s14, 3
      %p128 = scmp.ne.s32.totalorder %s123, %s125
      %p129 = scmp.eq.s32.totalorder %s14, 0
      %p130 = por %p128, %p129
      %p131 = scmp.ne.s32.totalorder %s123, %s125
      %p132 = scmp.eq.s32.totalorder %s19, 3
      %p133 = por %p131, %p132
      %p134 = scmp.ne.s32.totalorder %s125, %s126
      %p135 = scmp.eq.s32.totalorder %s19, 0
      %p136 = por %p134, %p135
      %p137 = scmp.ne.s32.totalorder %s125, %s126
      %p138 = scmp.eq.s32.totalorder %s20, 3
      %p139 = por %p137, %p138
      %p141 = scmp.ne.s32.totalorder %s126, %s140
      %p142 = scmp.eq.s32.totalorder %s20, 0
      %p143 = por %p141, %p142
      %s144 = ssub.s32 %s21, %s33
      %s145 = ssub.s32 %s22, %s29
      %s146 = sor.u32 %s144, %s145
      %p147 = scmp.eq.s32.totalorder %s146, 0
      %s149 = sadd.s32 %s148, 1
      %s150 = scalar_select %p147, %s148, %s149
      %p153 = pneg %p147
      %p154 = scmp.eq.s32.totalorder %s14, 3
      %p155 = por %p153, %p154
      %p156 = scmp.ne.s32.totalorder %s148, %s151
      %p157 = scmp.eq.s32.totalorder %s14, 0
      %p158 = por %p156, %p157
      %p159 = scmp.ne.s32.totalorder %s148, %s151
      %p160 = scmp.eq.s32.totalorder %s19, 3
      %p161 = por %p159, %p160
      %p162 = scmp.ne.s32.totalorder %s151, %s152
      %p163 = scmp.eq.s32.totalorder %s19, 0
      %p164 = por %p162, %p163
      %p165 = scmp.ne.s32.totalorder %s151, %s152
      %p166 = scmp.eq.s32.totalorder %s20, 3
      %p167 = por %p165, %p166
      %p169 = scmp.ne.s32.totalorder %s152, %s168
      %p170 = scmp.eq.s32.totalorder %s20, 0
      %p171 = por %p169, %p170
      %p172 = scmp.le.s32.totalorder 1, %s14
      %p173 = scmp.lt.s32.totalorder %s14, 5
      %p174 = pnand %p172, %p173
      %p175 = pneg %p174
      // Predicated region
      $region9: #{tpu_custom_call.1} parent=5 // pred_check
        _
      $region10: #{tpu_custom_call.1} parent=5 // pred_check_branch
        %177 = sbr.rel (%p174) target = $region12
      $region11: #{tpu_custom_call.1} parent=5 // pred_region
        %s178 = ssub.s32 %s14, 1
        // Predicated region
        $region13: #{tpu_custom_call.1} parent=11 // pred_check
          %p179 = pneg %p73
        $region14: #{tpu_custom_call.1} parent=11 // pred_check_branch
          %181 = sbr.rel (%p179) target = $region16
        $region15: #{tpu_custom_call.1} parent=11 // pred_region
          _
        $region16: #{tpu_custom_call.1} parent=11 // pred_fallthru
          _
        // Predicated region
        $region17: #{tpu_custom_call.1} parent=11 // pred_check
          %p182 = pneg %p94
        $region18: #{tpu_custom_call.1} parent=11 // pred_check_branch
          %184 = sbr.rel (%p182) target = $region20
        $region19: #{tpu_custom_call.1} parent=11 // pred_region
          _
        $region20: #{tpu_custom_call.1} parent=11 // pred_fallthru
          _
        // Predicated region
        $region21: #{tpu_custom_call.1} parent=11 // pred_check
          %p185 = pneg %p115
        $region22: #{tpu_custom_call.1} parent=11 // pred_check_branch
          %187 = sbr.rel (%p185) target = $region24
        $region23: #{tpu_custom_call.1} parent=11 // pred_region
          _
        $region24: #{tpu_custom_call.1} parent=11 // pred_fallthru
          _
        // Predicated region
        $region25: #{tpu_custom_call.1} parent=11 // pred_check
          %p188 = pneg %p136
        $region26: #{tpu_custom_call.1} parent=11 // pred_check_branch
          %190 = sbr.rel (%p188) target = $region28
        $region27: #{tpu_custom_call.1} parent=11 // pred_region
          _
        $region28: #{tpu_custom_call.1} parent=11 // pred_fallthru
          _
      $region12: #{tpu_custom_call.1} parent=5 // pred_fallthru
        _
      %p191 = scmp.lt.s32.totalorder %s14, 4
      // Predicated region
      $region29: #{tpu_custom_call.1} parent=5 // pred_check
        %p192 = pneg %p191
      $region30: #{tpu_custom_call.1} parent=5 // pred_check_branch
        %194 = sbr.rel (%p192) target = $region32
      $region31: #{tpu_custom_call.1} parent=5 // pred_region
        // Predicated region
        $region33: #{tpu_custom_call.1} parent=31 // pred_check
          %p195 = pneg %p46
        $region34: #{tpu_custom_call.1} parent=31 // pred_check_branch
          %197 = sbr.rel (%p195) target = $region36
        $region35: #{tpu_custom_call.1} parent=31 // pred_region
          %p198 = scmp.lt.s32.totalorder %s21, 1
          %s199 = scalar_select %p198, %s21, 1
          %s200 = smul.addr %s199, 54
          %s201 = smul.addr %s200, 4
          %s202 = scalar_lea.vmem %s0, %s201
        $region36: #{tpu_custom_call.1} parent=31 // pred_fallthru
          _
      $region32: #{tpu_custom_call.1} parent=5 // pred_fallthru
        _
      %p203 = scmp.le.s32.totalorder 1, %s14
      %p204 = scmp.lt.s32.totalorder %s14, 5
      %p205 = pnand %p203, %p204
      %p206 = pneg %p205
      // Predicated region
      $region37: #{tpu_custom_call.1} parent=5 // pred_check
        _
      $region38: #{tpu_custom_call.1} parent=5 // pred_check_branch
        %208 = sbr.rel (%p205) target = $region40
      $region39: #{tpu_custom_call.1} parent=5 // pred_region
        %s209 = ssub.s32 %s14, 1
        %p210 = scmp.lt.s32.totalorder %s23, 1
        %s211 = scalar_select %p210, %s23, 1
        %s212 = smul.addr %s211, 54
        %s213 = smul.addr %s212, 4
        %s214 = scalar_lea.vmem %s0, %s213
        %p215 = pneg %p52
        %p216 = pneg %p49
        %p217 = pneg %p73
        %p218 = pneg %p70
        %p219 = pneg %p94
        %p220 = pneg %p91
        %p221 = pneg %p115
        %p222 = pneg %p112
        %p223 = pneg %p136
        %p224 = pneg %p133
        %p225 = pneg %p164
        %p226 = pneg %p161
        %s227 = sand.u32 %s151, 1
        %s228 = scalar_lea.sflag [#allocation3], %s227
        %s229 = sand.u32 %s151, 1
        %s230 = smul.addr %s229, 16
        %s231 = scalar_lea.vmem [#allocation2], %s230
        %p232 = scmp.lt.s32.totalorder %s23, 1
        %s233 = scalar_select %p232, %s23, 1
        %s234 = smul.addr %s233, 54
        %s235 = smul.addr %s234, 4
        %s236 = scalar_lea.vmem %s0, %s235
        %s238 = smul.u32 %s24, 8
        %s239 = smul.u32 %s238, 3
        %s240 = smul.addr %s239, 4
        %s241 = scalar_lea.vmem %s236, %s240
        %v242 = vld [vmem:[%s241] sm:$0xf]
        %v243 = vld [vmem:[%s241 + $0x4] sm:$0xf]
        %v244 = vld [vmem:[%s241 + $0x8] sm:$0x1]
        %v245 = vld [vmem:[%s241 + $0xc] sm:$0xf]
        %v246 = vld [vmem:[%s241 + $0x10] sm:$0xf]
        %v247 = vld [vmem:[%s241 + $0x14] sm:$0x1]
        %v248 = vld [vmem:[%s241 + $0x18] sm:$0xf]
        %v249 = vld [vmem:[%s241 + $0x1c] sm:$0xf]
        %v250 = vld [vmem:[%s241 + $0x20] sm:$0x1]
        %v251 = vld [vmem:[%s241 + $0x24] sm:$0xf]
        %v252 = vld [vmem:[%s241 + $0x28] sm:$0xf]
        %v253 = vld [vmem:[%s241 + $0x2c] sm:$0x1]
        %v254 = vld [vmem:[%s241 + $0x30] sm:$0xf]
        %v255 = vld [vmem:[%s241 + $0x34] sm:$0xf]
        %v256 = vld [vmem:[%s241 + $0x38] sm:$0x1]
        %v257 = vld [vmem:[%s241 + $0x3c] sm:$0xf]
        %v258 = vld [vmem:[%s241 + $0x40] sm:$0xf]
        %v259 = vld [vmem:[%s241 + $0x44] sm:$0x1]
        %v260 = vld [vmem:[%s241 + $0x48] sm:$0xf]
        %v261 = vld [vmem:[%s241 + $0x4c] sm:$0xf]
        %v262 = vld [vmem:[%s241 + $0x50] sm:$0x1]
        %v263 = vld [vmem:[%s241 + $0x54] sm:$0xf]
        %v264 = vld [vmem:[%s241 + $0x58] sm:$0xf]
        %v265 = vld [vmem:[%s241 + $0x5c] sm:$0x1]
        %v266 = vld [vmem:[%s241 + $0x60] sm:$0xf]
        %v267 = vld [vmem:[%s241 + $0x64] sm:$0xf]
        %v268 = vld [vmem:[%s241 + $0x68] sm:$0x1]
        %v269 = vld [vmem:[%s241 + $0x6c] sm:$0xf]
        %v270 = vld [vmem:[%s241 + $0x70] sm:$0xf]
        %v271 = vld [vmem:[%s241 + $0x74] sm:$0x1]
        %vm272 = vsmask.f32 3328
        %vm273 = vsmask.f32 7440
        %vm274 = vmor %vm272, %vm273
        %v276 = vshrl.u32 %v242, 16
        %v278 = vrot.slane %v276, 4
        %v279 = vshll.u32 %v242, 16
        %v281 = vrot.slane %v279, 5
        %v282 = vor.u32 %v278, %v281
        %v283 = vrot.slane %v282, 4
        %v285 = vshll.u32 %v243, 16
        %v287 = vrot.slane %v285, 5
        %v288 = vsel %vm274, %v283, %v287
        %v289 = vshrl.u32 %v243, 16
        %v291 = vrot.slane %v289, 4
        %v292 = vor.u32 %v291, %v287
        %v293 = vrot.slane %v292, 4
        %v295 = vshll.u32 %v244, 16
        %v297 = vrot.slane %v295, 5
        %v298 = vsel %vm274, %v293, %v297
        %v300 = vshrl.u32 %v245, 16
        %v302 = vrot.slane %v300, 4
        %v303 = vshll.u32 %v245, 16
        %v305 = vrot.slane %v303, 5
        %v306 = vor.u32 %v302, %v305
        %v307 = vrot.slane %v306, 4
        %v309 = vshll.u32 %v246, 16
        %v311 = vrot.slane %v309, 5
        %v312 = vsel %vm274, %v307, %v311
        %v313 = vshrl.u32 %v246, 16
        %v315 = vrot.slane %v313, 4
        %v316 = vor.u32 %v315, %v311
        %v317 = vrot.slane %v316, 4
        %v319 = vshll.u32 %v247, 16
        %v321 = vrot.slane %v319, 5
        %v322 = vsel %vm274, %v317, %v321
        %v324 = vshrl.u32 %v248, 16
        %v326 = vrot.slane %v324, 4
        %v327 = vshll.u32 %v248, 16
        %v329 = vrot.slane %v327, 5
        %v330 = vor.u32 %v326, %v329
        %v331 = vrot.slane %v330, 4
        %v333 = vshll.u32 %v249, 16
        %v335 = vrot.slane %v333, 5
        %v336 = vsel %vm274, %v331, %v335
        %v337 = vshrl.u32 %v249, 16
        %v339 = vrot.slane %v337, 4
        %v340 = vor.u32 %v339, %v335
        %v341 = vrot.slane %v340, 4
        %v343 = vshll.u32 %v250, 16
        %v345 = vrot.slane %v343, 5
        %v346 = vsel %vm274, %v341, %v345
        %v348 = vshrl.u32 %v251, 16
        %v350 = vrot.slane %v348, 4
        %v351 = vshll.u32 %v251, 16
        %v353 = vrot.slane %v351, 5
        %v354 = vor.u32 %v350, %v353
        %v355 = vrot.slane %v354, 4
        %v357 = vshll.u32 %v252, 16
        %v359 = vrot.slane %v357, 5
        %v360 = vsel %vm274, %v355, %v359
        %v361 = vshrl.u32 %v252, 16
        %v363 = vrot.slane %v361, 4
        %v364 = vor.u32 %v363, %v359
        %v365 = vrot.slane %v364, 4
        %v367 = vshll.u32 %v253, 16
        %v369 = vrot.slane %v367, 5
        %v370 = vsel %vm274, %v365, %v369
        %v372 = vshrl.u32 %v254, 16
        %v374 = vrot.slane %v372, 4
        %v375 = vshll.u32 %v254, 16
        %v377 = vrot.slane %v375, 5
        %v378 = vor.u32 %v374, %v377
        %v379 = vrot.slane %v378, 4
        %v381 = vshll.u32 %v255, 16
        %v383 = vrot.slane %v381, 5
        %v384 = vsel %vm274, %v379, %v383
        %v385 = vshrl.u32 %v255, 16
        %v387 = vrot.slane %v385, 4
        %v388 = vor.u32 %v387, %v383
        %v389 = vrot.slane %v388, 4
        %v391 = vshll.u32 %v256, 16
        %v393 = vrot.slane %v391, 5
        %v394 = vsel %vm274, %v389, %v393
        %v396 = vshrl.u32 %v257, 16
        %v398 = vrot.slane %v396, 4
        %v399 = vshll.u32 %v257, 16
        %v401 = vrot.slane %v399, 5
        %v402 = vor.u32 %v398, %v401
        %v403 = vrot.slane %v402, 4
        %v405 = vshll.u32 %v258, 16
        %v407 = vrot.slane %v405, 5
        %v408 = vsel %vm274, %v403, %v407
        %v409 = vshrl.u32 %v258, 16
        %v411 = vrot.slane %v409, 4
        %v412 = vor.u32 %v411, %v407
        %v413 = vrot.slane %v412, 4
        %v415 = vshll.u32 %v259, 16
        %v417 = vrot.slane %v415, 5
        %v418 = vsel %vm274, %v413, %v417
        %v420 = vshrl.u32 %v260, 16
        %v422 = vrot.slane %v420, 4
        %v423 = vshll.u32 %v260, 16
        %v425 = vrot.slane %v423, 5
        %v426 = vor.u32 %v422, %v425
        %v427 = vrot.slane %v426, 4
        %v429 = vshll.u32 %v261, 16
        %v431 = vrot.slane %v429, 5
        %v432 = vsel %vm274, %v427, %v431
        %v433 = vshrl.u32 %v261, 16
        %v435 = vrot.slane %v433, 4
        %v436 = vor.u32 %v435, %v431
        %v437 = vrot.slane %v436, 4
        %v439 = vshll.u32 %v262, 16
        %v441 = vrot.slane %v439, 5
        %v442 = vsel %vm274, %v437, %v441
        %v444 = vshrl.u32 %v263, 16
        %v446 = vrot.slane %v444, 4
        %v447 = vshll.u32 %v263, 16
        %v449 = vrot.slane %v447, 5
        %v450 = vor.u32 %v446, %v449
        %v451 = vrot.slane %v450, 4
        %v453 = vshll.u32 %v264, 16
        %v455 = vrot.slane %v453, 5
        %v456 = vsel %vm274, %v451, %v455
        %v457 = vshrl.u32 %v264, 16
        %v459 = vrot.slane %v457, 4
        %v460 = vor.u32 %v459, %v455
        %v461 = vrot.slane %v460, 4
        %v463 = vshll.u32 %v265, 16
        %v465 = vrot.slane %v463, 5
        %v466 = vsel %vm274, %v461, %v465
        %vm491 = vcmask 1042432
        %vm492 = vcmask 1046532
        %vm493 = vmor %vm491, %vm492
        %v494 = vrot.slane %v242, 5
        %v495 = vrot.slane %v494, 4
        %v496 = vrot.slane %v243, 5
        %v497 = vsel %vm493, %v495, %v496
        %v498 = vrot.slane %v496, 4
        %v499 = vrot.slane %v244, 5
        %v500 = vsel %vm493, %v498, %v499
        %v501 = vrot.slane %v245, 5
        %v502 = vrot.slane %v501, 4
        %v503 = vrot.slane %v246, 5
        %v504 = vsel %vm493, %v502, %v503
        %v505 = vrot.slane %v503, 4
        %v506 = vrot.slane %v247, 5
        %v507 = vsel %vm493, %v505, %v506
        %v508 = vrot.slane %v248, 5
        %v509 = vrot.slane %v508, 4
        %v510 = vrot.slane %v249, 5
        %v511 = vsel %vm493, %v509, %v510
        %v512 = vrot.slane %v510, 4
        %v513 = vrot.slane %v250, 5
        %v514 = vsel %vm493, %v512, %v513
        %v515 = vrot.slane %v251, 5
        %v516 = vrot.slane %v515, 4
        %v517 = vrot.slane %v252, 5
        %v518 = vsel %vm493, %v516, %v517
        %v519 = vrot.slane %v517, 4
        %v520 = vrot.slane %v253, 5
        %v521 = vsel %vm493, %v519, %v520
        %v522 = vrot.slane %v254, 5
        %v523 = vrot.slane %v522, 4
        %v524 = vrot.slane %v255, 5
        %v525 = vsel %vm493, %v523, %v524
        %v526 = vrot.slane %v524, 4
        %v527 = vrot.slane %v256, 5
        %v528 = vsel %vm493, %v526, %v527
        %v529 = vrot.slane %v257, 5
        %v530 = vrot.slane %v529, 4
        %v531 = vrot.slane %v258, 5
        %v532 = vsel %vm493, %v530, %v531
        %v533 = vrot.slane %v531, 4
        %v534 = vrot.slane %v259, 5
        %v535 = vsel %vm493, %v533, %v534
        %v536 = vrot.slane %v260, 5
        %v537 = vrot.slane %v536, 4
        %v538 = vrot.slane %v261, 5
        %v539 = vsel %vm493, %v537, %v538
        %v540 = vrot.slane %v538, 4
        %v541 = vrot.slane %v262, 5
        %v542 = vsel %vm493, %v540, %v541
        %v543 = vrot.slane %v263, 5
        %v544 = vrot.slane %v543, 4
        %v545 = vrot.slane %v264, 5
        %v546 = vsel %vm493, %v544, %v545
        %v547 = vrot.slane %v545, 4
        %v548 = vrot.slane %v265, 5
        %v549 = vsel %vm493, %v547, %v548
        %v551 = vshrl.u32 %v266, 16
        %v553 = vrot.slane %v551, 4
        %v554 = vshll.u32 %v266, 16
        %v556 = vrot.slane %v554, 5
        %v557 = vor.u32 %v553, %v556
        %v558 = vrot.slane %v557, 4
        %v560 = vshll.u32 %v267, 16
        %v562 = vrot.slane %v560, 5
        %v563 = vsel %vm274, %v558, %v562
        %v564 = vshrl.u32 %v267, 16
        %v566 = vrot.slane %v564, 4
        %v567 = vor.u32 %v566, %v562
        %v568 = vrot.slane %v567, 4
        %v570 = vshll.u32 %v268, 16
        %v572 = vrot.slane %v570, 5
        %v573 = vsel %vm274, %v568, %v572
        %v577 = vrot.slane %v266, 5
        %v578 = vrot.slane %v577, 4
        %v579 = vrot.slane %v267, 5
        %v580 = vsel %vm493, %v578, %v579
        %v581 = vrot.slane %v579, 4
        %v582 = vrot.slane %v268, 5
        %v583 = vsel %vm493, %v581, %v582
        %v585 = vshrl.u32 %v269, 16
        %v587 = vrot.slane %v585, 4
        %v588 = vshll.u32 %v269, 16
        %v590 = vrot.slane %v588, 5
        %v591 = vor.u32 %v587, %v590
        %v592 = vrot.slane %v591, 4
        %v594 = vshll.u32 %v270, 16
        %v596 = vrot.slane %v594, 5
        %v597 = vsel %vm274, %v592, %v596
        %v598 = vshrl.u32 %v270, 16
        %v600 = vrot.slane %v598, 4
        %v601 = vor.u32 %v600, %v596
        %v602 = vrot.slane %v601, 4
        %v604 = vshll.u32 %v271, 16
        %v606 = vrot.slane %v604, 5
        %v607 = vsel %vm274, %v602, %v606
        %v611 = vrot.slane %v269, 5
        %v612 = vrot.slane %v611, 4
        %v613 = vrot.slane %v270, 5
        %v614 = vsel %vm493, %v612, %v613
        %v615 = vrot.slane %v613, 4
        %v616 = vrot.slane %v271, 5
        %v617 = vsel %vm493, %v615, %v616
        %v618 = vunpack.c.l.b16 %v242
        %v619 = vunpack.c.l.b16 %v243
        %v620 = vunpack.c.l.b16 %v245
        %v621 = vunpack.c.l.b16 %v246
        %v622 = vunpack.c.l.b16 %v248
        %v623 = vunpack.c.l.b16 %v249
        %v624 = vunpack.c.l.b16 %v251
        %v625 = vunpack.c.l.b16 %v252
        %v626 = vunpack.c.l.b16 %v254
        %v627 = vunpack.c.l.b16 %v255
        %v628 = vunpack.c.l.b16 %v257
        %v629 = vunpack.c.l.b16 %v258
        %v630 = vunpack.c.l.b16 %v260
        %v631 = vunpack.c.l.b16 %v261
        %v632 = vunpack.c.l.b16 %v263
        %v633 = vunpack.c.l.b16 %v264
        %v634 = vpack.c.b16 %v619, %v618
        %v635 = vpack.c.b16 %v621, %v620
        %v636 = vpack.c.b16 %v623, %v622
        %v637 = vpack.c.b16 %v625, %v624
        %v638 = vpack.c.b16 %v627, %v626
        %v639 = vpack.c.b16 %v629, %v628
        %v640 = vpack.c.b16 %v631, %v630
        %v641 = vpack.c.b16 %v633, %v632
        %v642 = vunpack.c.l.b16 %v288
        %v643 = vunpack.c.l.b16 %v298
        %v644 = vunpack.c.l.b16 %v312
        %v645 = vunpack.c.l.b16 %v322
        %v646 = vunpack.c.l.b16 %v336
        %v647 = vunpack.c.l.b16 %v346
        %v648 = vunpack.c.l.b16 %v360
        %v649 = vunpack.c.l.b16 %v370
        %v650 = vunpack.c.l.b16 %v384
        %v651 = vunpack.c.l.b16 %v394
        %v652 = vunpack.c.l.b16 %v408
        %v653 = vunpack.c.l.b16 %v418
        %v654 = vunpack.c.l.b16 %v432
        %v655 = vunpack.c.l.b16 %v442
        %v656 = vunpack.c.l.b16 %v456
        %v657 = vunpack.c.l.b16 %v466
        %v658 = vpack.c.b16 %v643, %v642
        %v659 = vpack.c.b16 %v645, %v644
        %v660 = vpack.c.b16 %v647, %v646
        %v661 = vpack.c.b16 %v649, %v648
        %v662 = vpack.c.b16 %v651, %v650
        %v663 = vpack.c.b16 %v653, %v652
        %v664 = vpack.c.b16 %v655, %v654
        %v665 = vpack.c.b16 %v657, %v656
        %666 = vrot.lane.b32.xlu0 %v658, 4
        %v667 = vpop.permute.xlu0 %666
        %668 = vrot.lane.b32.xlu0 %v659, 4
        %v669 = vpop.permute.xlu0 %668
        %670 = vrot.lane.b32.xlu0 %v660, 4
        %v671 = vpop.permute.xlu0 %670
        %672 = vrot.lane.b32.xlu0 %v661, 4
        %v673 = vpop.permute.xlu0 %672
        %674 = vrot.lane.b32.xlu0 %v662, 4
        %v675 = vpop.permute.xlu0 %674
        %676 = vrot.lane.b32.xlu0 %v663, 4
        %v677 = vpop.permute.xlu0 %676
        %678 = vrot.lane.b32.xlu0 %v664, 4
        %v679 = vpop.permute.xlu0 %678
        %680 = vrot.lane.b32.xlu0 %v665, 4
        %v681 = vpop.permute.xlu0 %680
        %v682 = vunpack.c.l.b16 %v497
        %v683 = vunpack.c.l.b16 %v500
        %v684 = vunpack.c.l.b16 %v504
        %v685 = vunpack.c.l.b16 %v507
        %v686 = vunpack.c.l.b16 %v511
        %v687 = vunpack.c.l.b16 %v514
        %v688 = vunpack.c.l.b16 %v518
        %v689 = vunpack.c.l.b16 %v521
        %v690 = vunpack.c.l.b16 %v525
        %v691 = vunpack.c.l.b16 %v528
        %v692 = vunpack.c.l.b16 %v532
        %v693 = vunpack.c.l.b16 %v535
        %v694 = vunpack.c.l.b16 %v539
        %v695 = vunpack.c.l.b16 %v542
        %v696 = vunpack.c.l.b16 %v546
        %v697 = vunpack.c.l.b16 %v549
        %v698 = vpack.c.b16 %v683, %v682
        %v699 = vpack.c.b16 %v685, %v684
        %v700 = vpack.c.b16 %v687, %v686
        %v701 = vpack.c.b16 %v689, %v688
        %v702 = vpack.c.b16 %v691, %v690
        %v703 = vpack.c.b16 %v693, %v692
        %v704 = vpack.c.b16 %v695, %v694
        %v705 = vpack.c.b16 %v697, %v696
        %706 = vrot.lane.b32.xlu0 %v698, 8
        %v707 = vpop.permute.xlu0 %706
        %708 = vrot.lane.b32.xlu0 %v699, 8
        %v709 = vpop.permute.xlu0 %708
        %710 = vrot.lane.b32.xlu0 %v700, 8
        %v711 = vpop.permute.xlu0 %710
        %712 = vrot.lane.b32.xlu0 %v701, 8
        %v713 = vpop.permute.xlu0 %712
        %714 = vrot.lane.b32.xlu0 %v702, 8
        %v715 = vpop.permute.xlu0 %714
        %716 = vrot.lane.b32.xlu0 %v703, 8
        %v717 = vpop.permute.xlu0 %716
        %718 = vrot.lane.b32.xlu0 %v704, 8
        %v719 = vpop.permute.xlu0 %718
        %720 = vrot.lane.b32.xlu0 %v705, 8
        %v721 = vpop.permute.xlu0 %720
        %v722 = vunpack.c.l.b16 %v266
        %v723 = vunpack.c.l.b16 %v267
        %v724 = vpack.c.b16 %v723, %v722
        %725 = vrot.lane.b32.xlu0 %v635, 12
        %v726 = vpop.permute.xlu0 %725
        %727 = vrot.lane.b32.xlu0 %v636, 12
        %v728 = vpop.permute.xlu0 %727
        %729 = vrot.lane.b32.xlu0 %v637, 12
        %v730 = vpop.permute.xlu0 %729
        %731 = vrot.lane.b32.xlu0 %v638, 12
        %v732 = vpop.permute.xlu0 %731
        %733 = vrot.lane.b32.xlu0 %v639, 12
        %v734 = vpop.permute.xlu0 %733
        %735 = vrot.lane.b32.xlu0 %v640, 12
        %v736 = vpop.permute.xlu0 %735
        %737 = vrot.lane.b32.xlu0 %v641, 12
        %v738 = vpop.permute.xlu0 %737
        %739 = vrot.lane.b32.xlu0 %v724, 12
        %v740 = vpop.permute.xlu0 %739
        %v741 = vunpack.c.l.b16 %v563
        %v742 = vunpack.c.l.b16 %v573
        %v743 = vpack.c.b16 %v742, %v741
        %744 = vrot.lane.b32.xlu0 %v659, 16
        %v745 = vpop.permute.xlu0 %744
        %746 = vrot.lane.b32.xlu0 %v660, 16
        %v747 = vpop.permute.xlu0 %746
        %748 = vrot.lane.b32.xlu0 %v661, 16
        %v749 = vpop.permute.xlu0 %748
        %750 = vrot.lane.b32.xlu0 %v662, 16
        %v751 = vpop.permute.xlu0 %750
        %752 = vrot.lane.b32.xlu0 %v663, 16
        %v753 = vpop.permute.xlu0 %752
        %754 = vrot.lane.b32.xlu0 %v664, 16
        %v755 = vpop.permute.xlu0 %754
        %756 = vrot.lane.b32.xlu0 %v665, 16
        %v757 = vpop.permute.xlu0 %756
        %758 = vrot.lane.b32.xlu0 %v743, 16
        %v759 = vpop.permute.xlu0 %758
        %v760 = vunpack.c.l.b16 %v580
        %v761 = vunpack.c.l.b16 %v583
        %v762 = vpack.c.b16 %v761, %v760
        %763 = vrot.lane.b32.xlu0 %v699, 20
        %v764 = vpop.permute.xlu0 %763
        %765 = vrot.lane.b32.xlu0 %v700, 20
        %v766 = vpop.permute.xlu0 %765
        %767 = vrot.lane.b32.xlu0 %v701, 20
        %v768 = vpop.permute.xlu0 %767
        %769 = vrot.lane.b32.xlu0 %v702, 20
        %v770 = vpop.permute.xlu0 %769
        %771 = vrot.lane.b32.xlu0 %v703, 20
        %v772 = vpop.permute.xlu0 %771
        %773 = vrot.lane.b32.xlu0 %v704, 20
        %v774 = vpop.permute.xlu0 %773
        %775 = vrot.lane.b32.xlu0 %v705, 20
        %v776 = vpop.permute.xlu0 %775
        %777 = vrot.lane.b32.xlu0 %v762, 20
        %v778 = vpop.permute.xlu0 %777
        %v779 = vunpack.c.l.b16 %v269
        %v780 = vunpack.c.l.b16 %v270
        %v781 = vpack.c.b16 %v780, %v779
        %782 = vrot.lane.b32.xlu0 %v636, 24
        %v783 = vpop.permute.xlu0 %782
        %784 = vrot.lane.b32.xlu0 %v637, 24
        %v785 = vpop.permute.xlu0 %784
        %786 = vrot.lane.b32.xlu0 %v638, 24
        %v787 = vpop.permute.xlu0 %786
        %788 = vrot.lane.b32.xlu0 %v639, 24
        %v789 = vpop.permute.xlu0 %788
        %790 = vrot.lane.b32.xlu0 %v640, 24
        %v791 = vpop.permute.xlu0 %790
        %792 = vrot.lane.b32.xlu0 %v641, 24
        %v793 = vpop.permute.xlu0 %792
        %794 = vrot.lane.b32.xlu0 %v724, 24
        %v795 = vpop.permute.xlu0 %794
        %796 = vrot.lane.b32.xlu0 %v781, 24
        %v797 = vpop.permute.xlu0 %796
        %v798 = vunpack.c.l.b16 %v597
        %v799 = vunpack.c.l.b16 %v607
        %v800 = vpack.c.b16 %v799, %v798
        %801 = vrot.lane.b32.xlu0 %v660, 28
        %v802 = vpop.permute.xlu0 %801
        %803 = vrot.lane.b32.xlu0 %v661, 28
        %v804 = vpop.permute.xlu0 %803
        %805 = vrot.lane.b32.xlu0 %v662, 28
        %v806 = vpop.permute.xlu0 %805
        %807 = vrot.lane.b32.xlu0 %v663, 28
        %v808 = vpop.permute.xlu0 %807
        %809 = vrot.lane.b32.xlu0 %v664, 28
        %v810 = vpop.permute.xlu0 %809
        %811 = vrot.lane.b32.xlu0 %v665, 28
        %v812 = vpop.permute.xlu0 %811
        %813 = vrot.lane.b32.xlu0 %v743, 28
        %v814 = vpop.permute.xlu0 %813
        %815 = vrot.lane.b32.xlu0 %v800, 28
        %v816 = vpop.permute.xlu0 %815
        %v817 = vunpack.c.l.b16 %v614
        %v818 = vunpack.c.l.b16 %v617
        %v819 = vpack.c.b16 %v818, %v817
        %820 = vrot.lane.b32.xlu0 %v700, 32
        %v821 = vpop.permute.xlu0 %820
        %822 = vrot.lane.b32.xlu0 %v701, 32
        %v823 = vpop.permute.xlu0 %822
        %824 = vrot.lane.b32.xlu0 %v702, 32
        %v825 = vpop.permute.xlu0 %824
        %826 = vrot.lane.b32.xlu0 %v703, 32
        %v827 = vpop.permute.xlu0 %826
        %828 = vrot.lane.b32.xlu0 %v704, 32
        %v829 = vpop.permute.xlu0 %828
        %830 = vrot.lane.b32.xlu0 %v705, 32
        %v831 = vpop.permute.xlu0 %830
        %832 = vrot.lane.b32.xlu0 %v762, 32
        %v833 = vpop.permute.xlu0 %832
        %834 = vrot.lane.b32.xlu0 %v819, 32
        %v835 = vpop.permute.xlu0 %834
        %vm836 = vcmask 31744
        %v839 = vsel %vm836, %v634, %v667
        %v842 = vsel %vm836, %v635, %v669
        %v845 = vsel %vm836, %v636, %v671
        %v848 = vsel %vm836, %v637, %v673
        %v851 = vsel %vm836, %v638, %v675
        %v854 = vsel %vm836, %v639, %v677
        %v857 = vsel %vm836, %v640, %v679
        %v860 = vsel %vm836, %v641, %v681
        %vm861 = vcmask 64512
        %v863 = vsel %vm861, %v839, %v707
        %v865 = vsel %vm861, %v842, %v709
        %v867 = vsel %vm861, %v845, %v711
        %v869 = vsel %vm861, %v848, %v713
        %v871 = vsel %vm861, %v851, %v715
        %v873 = vsel %vm861, %v854, %v717
        %v875 = vsel %vm861, %v857, %v719
        %v877 = vsel %vm861, %v860, %v721
        %vm878 = vcmask 97280
        %v880 = vsel %vm878, %v863, %v726
        %v882 = vsel %vm878, %v865, %v728
        %v884 = vsel %vm878, %v867, %v730
        %v886 = vsel %vm878, %v869, %v732
        %v888 = vsel %vm878, %v871, %v734
        %v890 = vsel %vm878, %v873, %v736
        %v892 = vsel %vm878, %v875, %v738
        %v894 = vsel %vm878, %v877, %v740
        %vm895 = vcmask 130048
        %v897 = vsel %vm895, %v880, %v745
        %v899 = vsel %vm895, %v882, %v747
        %v901 = vsel %vm895, %v884, %v749
        %v903 = vsel %vm895, %v886, %v751
        %v905 = vsel %vm895, %v888, %v753
        %v907 = vsel %vm895, %v890, %v755
        %v909 = vsel %vm895, %v892, %v757
        %v911 = vsel %vm895, %v894, %v759
        %vm912 = vcmask 162816
        %v914 = vsel %vm912, %v897, %v764
        %v916 = vsel %vm912, %v899, %v766
        %v918 = vsel %vm912, %v901, %v768
        %v920 = vsel %vm912, %v903, %v770
        %v922 = vsel %vm912, %v905, %v772
        %v924 = vsel %vm912, %v907, %v774
        %v926 = vsel %vm912, %v909, %v776
        %v928 = vsel %vm912, %v911, %v778
        %vm929 = vcmask 195584
        %v931 = vsel %vm929, %v914, %v783
        %v933 = vsel %vm929, %v916, %v785
        %v935 = vsel %vm929, %v918, %v787
        %v937 = vsel %vm929, %v920, %v789
        %v939 = vsel %vm929, %v922, %v791
        %v941 = vsel %vm929, %v924, %v793
        %v943 = vsel %vm929, %v926, %v795
        %v945 = vsel %vm929, %v928, %v797
        %vm946 = vcmask 228352
        %v948 = vsel %vm946, %v931, %v802
        %v950 = vsel %vm946, %v933, %v804
        %v952 = vsel %vm946, %v935, %v806
        %v954 = vsel %vm946, %v937, %v808
        %v956 = vsel %vm946, %v939, %v810
        %v958 = vsel %vm946, %v941, %v812
        %v960 = vsel %vm946, %v943, %v814
        %v962 = vsel %vm946, %v945, %v816
        %vm963 = vcmask 261120
        %v965 = vsel %vm963, %v948, %v821
        %v967 = vsel %vm963, %v950, %v823
        %v969 = vsel %vm963, %v952, %v825
        %v971 = vsel %vm963, %v954, %v827
        %v973 = vsel %vm963, %v956, %v829
        %v975 = vsel %vm963, %v958, %v831
        %v977 = vsel %vm963, %v960, %v833
        %v979 = vsel %vm963, %v962, %v835
        %v980 = vld [vmem:[%s1] sm:$0xf]
        %v981 = vld [vmem:[%s1 + $0x4] sm:$0xf]
        %v982 = vld [vmem:[%s1 + $0x8] sm:$0xf]
        %v983 = vld [vmem:[%s1 + $0xc] sm:$0xf]
        %v984 = vld [vmem:[%s1 + $0x10] sm:$0x3]
        %v985 = vld [vmem:[%s2] sm:$0x1]
        %v987 = vlaneseq
        %v988 = vshrl.u32 %v987, 7
        %v989 = vsub.s32 0, %v988
        %v990 = vrot.slane %v985, %v989
        %v997 = vunpack.c.l.b16 %v980
        %v998 = vunpack.c.l.b16 %v981
        %v999 = vunpack.c.l.b16 %v982
        %v1000 = vunpack.c.l.b16 %v983
        %v1001 = vunpack.c.l.b16 %v984
        %v1002 = vpack.c.b16 %v998, %v997
        %v1003 = vpack.c.b16 %v1000, %v999
        %v1004 = vpack.c.b16 %v1001, %v1001
        %vm1007 = vcmask 293888
        %v1008 = vsel %vm1007, %v965, 0
        %v1010 = vsel %vm1007, %v967, 0
        %v1012 = vsel %vm1007, %v969, 0
        %v1014 = vsel %vm1007, %v971, 0
        %v1016 = vsel %vm1007, %v973, 0
        %v1018 = vsel %vm1007, %v975, 0
        %v1020 = vsel %vm1007, %v977, 0
        %v1022 = vsel %vm1007, %v979, 0
        %vm1024 = vcmask 1041408
        %v1026 = vsel %vm1024, %v1004, 0
        %1028 = vmatprep.subr.bf16.mxu0 0
        %1029 = vmatpush1.bf16.msra.mxu0 %v1002
        %1030 = vmatprep.subr.bf16.mxu0 0
        %1031 = vmatpush1.bf16.msra.mxu0 %v1003
        %1032 = vmatprep.subr.bf16.mxu0 0
        %1033 = vmatpush1.bf16.msra.mxu0 %v1026
        %1034 = vmatprep.subr.bf16.mxu0 0
        %1035 = vmatpush1.bf16.msra.mxu0 0
        %1036 = vmatprep.subr.bf16.mxu0 0
        %1037 = vmatpush1.bf16.msra.mxu0 0
        %1038 = vmatprep.subr.bf16.mxu0 0
        %1039 = vmatpush1.bf16.msra.mxu0 0
        %1040 = vmatprep.subr.bf16.mxu0 0
        %1041 = vmatpush1.bf16.msra.mxu0 0
        %1042 = vmatprep.subr.bf16.mxu0 0
        %1043 = vmatpush1.bf16.msra.mxu0 0
        %1044 = vmatprep.subr.bf16.mxu0 0
        %1045 = vmatpush1.bf16.msra.mxu0 0
        %1046 = vmatprep.subr.bf16.mxu0 0
        %1047 = vmatpush1.bf16.msra.mxu0 0
        %1048 = vmatprep.subr.bf16.mxu0 0
        %1049 = vmatpush1.bf16.msra.mxu0 0
        %1050 = vmatprep.subr.bf16.mxu0 0
        %1051 = vmatpush1.bf16.msra.mxu0 0
        %1052 = vmatprep.subr.bf16.mxu0 0
        %1053 = vmatpush1.bf16.msra.mxu0 0
        %1054 = vmatprep.subr.bf16.mxu0 0
        %1055 = vmatpush1.bf16.msra.mxu0 0
        %1056 = vmatprep.subr.bf16.mxu0 0
        %1057 = vmatpush1.bf16.msra.mxu0 0
        %1058 = vmatprep.subr.bf16.mxu0 0
        %1059 = vmatpush1.bf16.msra.mxu0 0
        %1060 = vmatprep.mubr.bf16.mxu0 0
        %1061 = vmatmul.mubr.bf16.gmra.mrb[0].mxu0 %v1008
        %v1062 = vpop.f32.mrb[0].mxu0
        %v1063 = vadd.f32 %v990, %v1062
        %v1064 = vpop.f32.mrb[0].mxu0
        %v1065 = vpop.f32.mrb[0].mxu0
        %v1066 = vadd.f32 %v990, %v1065
        %v1067 = vpop.f32.mrb[0].mxu0
        %1068 = vmatprep.mubr.bf16.mxu0 0
        %1069 = vmatmul.mubr.bf16.gmra.mrb[0].mxu0 %v1010
        %v1070 = vpop.f32.mrb[0].mxu0
        %v1071 = vadd.f32 %v990, %v1070
        %v1072 = vpop.f32.mrb[0].mxu0
        %v1073 = vpop.f32.mrb[0].mxu0
        %v1074 = vadd.f32 %v990, %v1073
        %v1075 = vpop.f32.mrb[0].mxu0
        %1076 = vmatprep.mubr.bf16.mxu0 0
        %1077 = vmatmul.mubr.bf16.gmra.mrb[0].mxu0 %v1012
        %v1078 = vpop.f32.mrb[0].mxu0
        %v1079 = vadd.f32 %v990, %v1078
        %v1080 = vpop.f32.mrb[0].mxu0
        %v1081 = vpop.f32.mrb[0].mxu0
        %v1082 = vadd.f32 %v990, %v1081
        %v1083 = vpop.f32.mrb[0].mxu0
        %1084 = vmatprep.mubr.bf16.mxu0 0
        %1085 = vmatmul.mubr.bf16.gmra.mrb[0].mxu0 %v1014
        %v1086 = vpop.f32.mrb[0].mxu0
        %v1087 = vadd.f32 %v990, %v1086
        %v1088 = vpop.f32.mrb[0].mxu0
        %v1089 = vpop.f32.mrb[0].mxu0
        %v1090 = vadd.f32 %v990, %v1089
        %v1091 = vpop.f32.mrb[0].mxu0
        %1092 = vmatprep.mubr.bf16.mxu0 0
        %1093 = vmatmul.mubr.bf16.gmra.mrb[0].mxu0 %v1016
        %v1094 = vpop.f32.mrb[0].mxu0
        %v1095 = vadd.f32 %v990, %v1094
        %v1096 = vpop.f32.mrb[0].mxu0
        %v1097 = vpop.f32.mrb[0].mxu0
        %v1098 = vadd.f32 %v990, %v1097
        %v1099 = vpop.f32.mrb[0].mxu0
        %1100 = vmatprep.mubr.bf16.mxu0 0
        %1101 = vmatmul.mubr.bf16.gmra.mrb[0].mxu0 %v1018
        %v1102 = vpop.f32.mrb[0].mxu0
        %v1103 = vadd.f32 %v990, %v1102
        %v1104 = vpop.f32.mrb[0].mxu0
        %v1105 = vpop.f32.mrb[0].mxu0
        %v1106 = vadd.f32 %v990, %v1105
        %v1107 = vpop.f32.mrb[0].mxu0
        %1108 = vmatprep.mubr.bf16.mxu0 0
        %1109 = vmatmul.mubr.bf16.gmra.mrb[0].mxu0 %v1020
        %v1110 = vpop.f32.mrb[0].mxu0
        %v1111 = vadd.f32 %v990, %v1110
        %v1112 = vpop.f32.mrb[0].mxu0
        %v1113 = vpop.f32.mrb[0].mxu0
        %v1114 = vadd.f32 %v990, %v1113
        %v1115 = vpop.f32.mrb[0].mxu0
        %1116 = vmatprep.mubr.bf16.mxu0 0
        %1117 = vmatmul.mubr.bf16.gmra.mrb[0].mxu0 %v1022
        %v1118 = vpop.f32.mrb[0].mxu0
        %v1119 = vadd.f32 %v990, %v1118
        %v1120 = vpop.f32.mrb[0].mxu0
        %v1121 = vpop.f32.mrb[0].mxu0
        %v1122 = vadd.f32 %v990, %v1121
        %v1123 = vpop.f32.mrb[0].mxu0
        %1124 = vdwg.mxu0
        %v1125 = vmax.f32 %v1063, 0.0
        %v1126 = vmax.f32 %v1066, 0.0
        %v1127 = vmax.f32 %v1071, 0.0
        %v1128 = vmax.f32 %v1074, 0.0
        %v1129 = vmax.f32 %v1079, 0.0
        %v1130 = vmax.f32 %v1082, 0.0
        %v1131 = vmax.f32 %v1087, 0.0
        %v1132 = vmax.f32 %v1090, 0.0
        %v1133 = vmax.f32 %v1095, 0.0
        %v1134 = vmax.f32 %v1098, 0.0
        %v1135 = vmax.f32 %v1103, 0.0
        %v1136 = vmax.f32 %v1106, 0.0
        %v1137 = vmax.f32 %v1111, 0.0
        %v1138 = vmax.f32 %v1114, 0.0
        %v1139 = vmax.f32 %v1119, 0.0
        %v1140 = vmax.f32 %v1122, 0.0
        %v1141 = vpack.c.bf16 %v1126, %v1125
        %v1142 = vpack.c.bf16 %v1128, %v1127
        %v1143 = vpack.c.bf16 %v1130, %v1129
        %v1144 = vpack.c.bf16 %v1132, %v1131
        %v1145 = vpack.c.bf16 %v1134, %v1133
        %v1146 = vpack.c.bf16 %v1136, %v1135
        %v1147 = vpack.c.bf16 %v1138, %v1137
        %v1148 = vpack.c.bf16 %v1140, %v1139
        %v1149 = vld [vmem:[%s3] sm:$0x3]
        %v1151 = vsel %vm836, %v1141, 0
        %v1154 = vsel %vm836, %v1142, 0
        %v1157 = vsel %vm836, %v1143, 0
        %v1160 = vsel %vm836, %v1144, 0
        %v1163 = vsel %vm836, %v1145, 0
        %v1166 = vsel %vm836, %v1146, 0
        %v1169 = vsel %vm836, %v1147, 0
        %v1172 = vsel %vm836, %v1148, 0
        %v1175 = vsel %vm1024, %v1149, 0
        %1177 = vmatprep.subr.bf16.mxu0 0
        %1178 = vmatpush1.bf16.msra.mxu0 %v1175
        %1179 = vmatprep.subr.bf16.mxu0 0
        %1180 = vmatpush1.bf16.msra.mxu0 0
        %1181 = vmatprep.subr.bf16.mxu0 0
        %1182 = vmatpush1.bf16.msra.mxu0 0
        %1183 = vmatprep.subr.bf16.mxu0 0
        %1184 = vmatpush1.bf16.msra.mxu0 0
        %1185 = vmatprep.subr.bf16.mxu0 0
        %1186 = vmatpush1.bf16.msra.mxu0 0
        %1187 = vmatprep.subr.bf16.mxu0 0
        %1188 = vmatpush1.bf16.msra.mxu0 0
        %1189 = vmatprep.subr.bf16.mxu0 0
        %1190 = vmatpush1.bf16.msra.mxu0 0
        %1191 = vmatprep.subr.bf16.mxu0 0
        %1192 = vmatpush1.bf16.msra.mxu0 0
        %1193 = vmatprep.subr.bf16.mxu0 0
        %1194 = vmatpush1.bf16.msra.mxu0 0
        %1195 = vmatprep.subr.bf16.mxu0 0
        %1196 = vmatpush1.bf16.msra.mxu0 0
        %1197 = vmatprep.subr.bf16.mxu0 0
        %1198 = vmatpush1.bf16.msra.mxu0 0
        %1199 = vmatprep.subr.bf16.mxu0 0
        %1200 = vmatpush1.bf16.msra.mxu0 0
        %1201 = vmatprep.subr.bf16.mxu0 0
        %1202 = vmatpush1.bf16.msra.mxu0 0
        %1203 = vmatprep.subr.bf16.mxu0 0
        %1204 = vmatpush1.bf16.msra.mxu0 0
        %1205 = vmatprep.subr.bf16.mxu0 0
        %1206 = vmatpush1.bf16.msra.mxu0 0
        %1207 = vmatprep.subr.bf16.mxu0 0
        %1208 = vmatpush1.bf16.msra.mxu0 0
        %1209 = vmatprep.mubr.bf16.mxu0 0
        %1210 = vmatmul.mubr.bf16.gmra.mrb[0].mxu0 %v1151
        %v1211 = vpop.f32.mrb[0].mxu0
        %v1212 = vadd.f32 0.0, %v1211
        %v1213 = vpop.f32.mrb[0].mxu0
        %v1214 = vpop.f32.mrb[0].mxu0
        %v1215 = vadd.f32 0.0, %v1214
        %v1216 = vpop.f32.mrb[0].mxu0
        %1217 = vmatprep.mubr.bf16.mxu0 0
        %1218 = vmatmul.mubr.bf16.gmra.mrb[0].mxu0 %v1154
        %v1219 = vpop.f32.mrb[0].mxu0
        %v1220 = vadd.f32 0.0, %v1219
        %v1221 = vpop.f32.mrb[0].mxu0
        %v1222 = vpop.f32.mrb[0].mxu0
        %v1223 = vadd.f32 0.0, %v1222
        %v1224 = vpop.f32.mrb[0].mxu0
        %1225 = vmatprep.mubr.bf16.mxu0 0
        %1226 = vmatmul.mubr.bf16.gmra.mrb[0].mxu0 %v1157
        %v1227 = vpop.f32.mrb[0].mxu0
        %v1228 = vadd.f32 0.0, %v1227
        %v1229 = vpop.f32.mrb[0].mxu0
        %v1230 = vpop.f32.mrb[0].mxu0
        %v1231 = vadd.f32 0.0, %v1230
        %v1232 = vpop.f32.mrb[0].mxu0
        %1233 = vmatprep.mubr.bf16.mxu0 0
        %1234 = vmatmul.mubr.bf16.gmra.mrb[0].mxu0 %v1160
        %v1235 = vpop.f32.mrb[0].mxu0
        %v1236 = vadd.f32 0.0, %v1235
        %v1237 = vpop.f32.mrb[0].mxu0
        %v1238 = vpop.f32.mrb[0].mxu0
        %v1239 = vadd.f32 0.0, %v1238
        %v1240 = vpop.f32.mrb[0].mxu0
        %1241 = vmatprep.mubr.bf16.mxu0 0
        %1242 = vmatmul.mubr.bf16.gmra.mrb[0].mxu0 %v1163
        %v1243 = vpop.f32.mrb[0].mxu0
        %v1244 = vadd.f32 0.0, %v1243
        %v1245 = vpop.f32.mrb[0].mxu0
        %v1246 = vpop.f32.mrb[0].mxu0
        %v1247 = vadd.f32 0.0, %v1246
        %v1248 = vpop.f32.mrb[0].mxu0
        %1249 = vmatprep.mubr.bf16.mxu0 0
        %1250 = vmatmul.mubr.bf16.gmra.mrb[0].mxu0 %v1166
        %v1251 = vpop.f32.mrb[0].mxu0
        %v1252 = vadd.f32 0.0, %v1251
        %v1253 = vpop.f32.mrb[0].mxu0
        %v1254 = vpop.f32.mrb[0].mxu0
        %v1255 = vadd.f32 0.0, %v1254
        %v1256 = vpop.f32.mrb[0].mxu0
        %1257 = vmatprep.mubr.bf16.mxu0 0
        %1258 = vmatmul.mubr.bf16.gmra.mrb[0].mxu0 %v1169
        %v1259 = vpop.f32.mrb[0].mxu0
        %v1260 = vadd.f32 0.0, %v1259
        %v1261 = vpop.f32.mrb[0].mxu0
        %v1262 = vpop.f32.mrb[0].mxu0
        %v1263 = vadd.f32 0.0, %v1262
        %v1264 = vpop.f32.mrb[0].mxu0
        %1265 = vmatprep.mubr.bf16.mxu0 0
        %1266 = vmatmul.mubr.bf16.gmra.mrb[0].mxu0 %v1172
        %v1267 = vpop.f32.mrb[0].mxu0
        %v1268 = vadd.f32 0.0, %v1267
        %v1269 = vpop.f32.mrb[0].mxu0
        %v1270 = vpop.f32.mrb[0].mxu0
        %v1271 = vadd.f32 0.0, %v1270
        %v1272 = vpop.f32.mrb[0].mxu0
        %1273 = vdwg.mxu0
        %v1274 = vld [vmem:[%s4] sm:$0xff]
        %v1275 = vld [vmem:[%s4 + $0x8] sm:$0xff]
        %v1276 = vld [vmem:[%s4 + $0x10] sm:$0xff]
        %v1277 = vld [vmem:[%s4 + $0x18] sm:$0xff]
        %v1279 = vsel %vm895, %v1274, 0
        %v1282 = vsel %vm895, %v1275, 0
        %v1285 = vsel %vm895, %v1276, 0
        %v1288 = vsel %vm895, %v1277, 0
        %1290 = vmatprep.subr.mxu0 0.0
        %1291 = vmatpush1.msra.mxu0 %v1212
        %1292 = vmatprep.subr.mxu0 0.0
        %1293 = vmatpush1.msra.mxu0 %v1215
        %1294 = vmatprep.subr.mxu0 0.0
        %1295 = vmatpush1.msra.mxu0 0.0
        %1296 = vmatprep.subr.mxu0 0.0
        %1297 = vmatpush1.msra.mxu0 0.0
        %1298 = vmatprep.subr.mxu0 0.0
        %1299 = vmatpush1.msra.mxu0 0.0
        %1300 = vmatprep.subr.mxu0 0.0
        %1301 = vmatpush1.msra.mxu0 0.0
        %1302 = vmatprep.subr.mxu0 0.0
        %1303 = vmatpush1.msra.mxu0 0.0
        %1304 = vmatprep.subr.mxu0 0.0
        %1305 = vmatpush1.msra.mxu0 0.0
        %1306 = vmatprep.subr.mxu0 0.0
        %1307 = vmatpush1.msra.mxu0 0.0
        %1308 = vmatprep.subr.mxu0 0.0
        %1309 = vmatpush1.msra.mxu0 0.0
        %1310 = vmatprep.subr.mxu0 0.0
        %1311 = vmatpush1.msra.mxu0 0.0
        %1312 = vmatprep.subr.mxu0 0.0
        %1313 = vmatpush1.msra.mxu0 0.0
        %1314 = vmatprep.subr.mxu0 0.0
        %1315 = vmatpush1.msra.mxu0 0.0
        %1316 = vmatprep.subr.mxu0 0.0
        %1317 = vmatpush1.msra.mxu0 0.0
        %1318 = vmatprep.subr.mxu0 0.0
        %1319 = vmatpush1.msra.mxu0 0.0
        %1320 = vmatprep.subr.mxu0 0.0
        %1321 = vmatpush1.msra.mxu0 0.0
        %1322 = vmatprep.subr.mxu0 0.0
        %1323 = vmatpush1.msra.mxu0 0.0
        %1324 = vmatprep.subr.mxu0 0.0
        %1325 = vmatpush1.msra.mxu0 0.0
        %1326 = vmatprep.subr.mxu0 0.0
        %1327 = vmatpush1.msra.mxu0 0.0
        %1328 = vmatprep.subr.mxu0 0.0
        %1329 = vmatpush1.msra.mxu0 0.0
        %1330 = vmatprep.subr.mxu0 0.0
        %1331 = vmatpush1.msra.mxu0 0.0
        %1332 = vmatprep.subr.mxu0 0.0
        %1333 = vmatpush1.msra.mxu0 0.0
        %1334 = vmatprep.subr.mxu0 0.0
        %1335 = vmatpush1.msra.mxu0 0.0
        %1336 = vmatprep.subr.mxu0 0.0
        %1337 = vmatpush1.msra.mxu0 0.0
        %1338 = vmatprep.subr.mxu0 0.0
        %1339 = vmatpush1.msra.mxu0 0.0
        %1340 = vmatprep.subr.mxu0 0.0
        %1341 = vmatpush1.msra.mxu0 0.0
        %1342 = vmatprep.subr.mxu0 0.0
        %1343 = vmatpush1.msra.mxu0 0.0
        %1344 = vmatprep.subr.mxu0 0.0
        %1345 = vmatpush1.msra.mxu0 0.0
        %1346 = vmatprep.subr.mxu0 0.0
        %1347 = vmatpush1.msra.mxu0 0.0
        %1348 = vmatprep.subr.mxu0 0.0
        %1349 = vmatpush1.msra.mxu0 0.0
        %1350 = vmatprep.subr.mxu0 0.0
        %1351 = vmatpush1.msra.mxu0 0.0
        %1352 = vmatprep.subr.mxu0 0.0
        %1353 = vmatpush1.msra.mxu0 0.0
        %1354 = vmatprep.mubr.f32.mxu0 0.0
        %1355 = vmatmul.mubr.f32.gmra.mrb[0].mxu0 %v1279
        %v1356 = vpop.f32.mrb[0].mxu0
        %v1357 = vadd.f32 0.0, %v1356
        %v1358 = vpop.f32.mrb[0].mxu0
        %1359 = vmatprep.mubr.f32.mxu0 0.0
        %1360 = vmatmul.mubr.f32.gmra.mrb[0].mxu0 %v1282
        %v1361 = vpop.f32.mrb[0].mxu0
        %v1362 = vadd.f32 0.0, %v1361
        %v1363 = vpop.f32.mrb[0].mxu0
        %1364 = vmatprep.mubr.f32.mxu0 0.0
        %1365 = vmatmul.mubr.f32.gmra.mrb[0].mxu0 %v1285
        %v1366 = vpop.f32.mrb[0].mxu0
        %v1367 = vadd.f32 0.0, %v1366
        %v1368 = vpop.f32.mrb[0].mxu0
        %1369 = vmatprep.mubr.f32.mxu0 0.0
        %1370 = vmatmul.mubr.f32.gmra.mrb[0].mxu0 %v1288
        %v1371 = vpop.f32.mrb[0].mxu0
        %v1372 = vadd.f32 0.0, %v1371
        %v1373 = vpop.f32.mrb[0].mxu0
        %1374 = vdwg.mxu0
        %1375 = vmatprep.subr.mxu0 0.0
        %1376 = vmatpush1.msra.mxu0 %v1220
        %1377 = vmatprep.subr.mxu0 0.0
        %1378 = vmatpush1.msra.mxu0 %v1223
        %1379 = vmatprep.subr.mxu0 0.0
        %1380 = vmatpush1.msra.mxu0 0.0
        %1381 = vmatprep.subr.mxu0 0.0
        %1382 = vmatpush1.msra.mxu0 0.0
        %1383 = vmatprep.subr.mxu0 0.0
        %1384 = vmatpush1.msra.mxu0 0.0
        %1385 = vmatprep.subr.mxu0 0.0
        %1386 = vmatpush1.msra.mxu0 0.0
        %1387 = vmatprep.subr.mxu0 0.0
        %1388 = vmatpush1.msra.mxu0 0.0
        %1389 = vmatprep.subr.mxu0 0.0
        %1390 = vmatpush1.msra.mxu0 0.0
        %1391 = vmatprep.subr.mxu0 0.0
        %1392 = vmatpush1.msra.mxu0 0.0
        %1393 = vmatprep.subr.mxu0 0.0
        %1394 = vmatpush1.msra.mxu0 0.0
        %1395 = vmatprep.subr.mxu0 0.0
        %1396 = vmatpush1.msra.mxu0 0.0
        %1397 = vmatprep.subr.mxu0 0.0
        %1398 = vmatpush1.msra.mxu0 0.0
        %1399 = vmatprep.subr.mxu0 0.0
        %1400 = vmatpush1.msra.mxu0 0.0
        %1401 = vmatprep.subr.mxu0 0.0
        %1402 = vmatpush1.msra.mxu0 0.0
        %1403 = vmatprep.subr.mxu0 0.0
        %1404 = vmatpush1.msra.mxu0 0.0
        %1405 = vmatprep.subr.mxu0 0.0
        %1406 = vmatpush1.msra.mxu0 0.0
        %1407 = vmatprep.subr.mxu0 0.0
        %1408 = vmatpush1.msra.mxu0 0.0
        %1409 = vmatprep.subr.mxu0 0.0
        %1410 = vmatpush1.msra.mxu0 0.0
        %1411 = vmatprep.subr.mxu0 0.0
        %1412 = vmatpush1.msra.mxu0 0.0
        %1413 = vmatprep.subr.mxu0 0.0
        %1414 = vmatpush1.msra.mxu0 0.0
        %1415 = vmatprep.subr.mxu0 0.0
        %1416 = vmatpush1.msra.mxu0 0.0
        %1417 = vmatprep.subr.mxu0 0.0
        %1418 = vmatpush1.msra.mxu0 0.0
        %1419 = vmatprep.subr.mxu0 0.0
        %1420 = vmatpush1.msra.mxu0 0.0
        %1421 = vmatprep.subr.mxu0 0.0
        %1422 = vmatpush1.msra.mxu0 0.0
        %1423 = vmatprep.subr.mxu0 0.0
        %1424 = vmatpush1.msra.mxu0 0.0
        %1425 = vmatprep.subr.mxu0 0.0
        %1426 = vmatpush1.msra.mxu0 0.0
        %1427 = vmatprep.subr.mxu0 0.0
        %1428 = vmatpush1.msra.mxu0 0.0
        %1429 = vmatprep.subr.mxu0 0.0
        %1430 = vmatpush1.msra.mxu0 0.0
        %1431 = vmatprep.subr.mxu0 0.0
        %1432 = vmatpush1.msra.mxu0 0.0
        %1433 = vmatprep.subr.mxu0 0.0
        %1434 = vmatpush1.msra.mxu0 0.0
        %1435 = vmatprep.subr.mxu0 0.0
        %1436 = vmatpush1.msra.mxu0 0.0
        %1437 = vmatprep.subr.mxu0 0.0
        %1438 = vmatpush1.msra.mxu0 0.0
        %1439 = vmatprep.mubr.f32.mxu0 0.0
        %1440 = vmatmul.mubr.f32.gmra.mrb[0].mxu0 %v1279
        %v1441 = vpop.f32.mrb[0].mxu0
        %v1442 = vadd.f32 0.0, %v1441
        %v1443 = vpop.f32.mrb[0].mxu0
        %1444 = vmatprep.mubr.f32.mxu0 0.0
        %1445 = vmatmul.mubr.f32.gmra.mrb[0].mxu0 %v1282
        %v1446 = vpop.f32.mrb[0].mxu0
        %v1447 = vadd.f32 0.0, %v1446
        %v1448 = vpop.f32.mrb[0].mxu0
        %1449 = vmatprep.mubr.f32.mxu0 0.0
        %1450 = vmatmul.mubr.f32.gmra.mrb[0].mxu0 %v1285
        %v1451 = vpop.f32.mrb[0].mxu0
        %v1452 = vadd.f32 0.0, %v1451
        %v1453 = vpop.f32.mrb[0].mxu0
        %1454 = vmatprep.mubr.f32.mxu0 0.0
        %1455 = vmatmul.mubr.f32.gmra.mrb[0].mxu0 %v1288
        %v1456 = vpop.f32.mrb[0].mxu0
        %v1457 = vadd.f32 0.0, %v1456
        %v1458 = vpop.f32.mrb[0].mxu0
        %1459 = vdwg.mxu0
        %1460 = vmatprep.subr.mxu0 0.0
        %1461 = vmatpush1.msra.mxu0 %v1228
        %1462 = vmatprep.subr.mxu0 0.0
        %1463 = vmatpush1.msra.mxu0 %v1231
        %1464 = vmatprep.subr.mxu0 0.0
        %1465 = vmatpush1.msra.mxu0 0.0
        %1466 = vmatprep.subr.mxu0 0.0
        %1467 = vmatpush1.msra.mxu0 0.0
        %1468 = vmatprep.subr.mxu0 0.0
        %1469 = vmatpush1.msra.mxu0 0.0
        %1470 = vmatprep.subr.mxu0 0.0
        %1471 = vmatpush1.msra.mxu0 0.0
        %1472 = vmatprep.subr.mxu0 0.0
        %1473 = vmatpush1.msra.mxu0 0.0
        %1474 = vmatprep.subr.mxu0 0.0
        %1475 = vmatpush1.msra.mxu0 0.0
        %1476 = vmatprep.subr.mxu0 0.0
        %1477 = vmatpush1.msra.mxu0 0.0
        %1478 = vmatprep.subr.mxu0 0.0
        %1479 = vmatpush1.msra.mxu0 0.0
        %1480 = vmatprep.subr.mxu0 0.0
        %1481 = vmatpush1.msra.mxu0 0.0
        %1482 = vmatprep.subr.mxu0 0.0
        %1483 = vmatpush1.msra.mxu0 0.0
        %1484 = vmatprep.subr.mxu0 0.0
        %1485 = vmatpush1.msra.mxu0 0.0
        %1486 = vmatprep.subr.mxu0 0.0
        %1487 = vmatpush1.msra.mxu0 0.0
        %1488 = vmatprep.subr.mxu0 0.0
        %1489 = vmatpush1.msra.mxu0 0.0
        %1490 = vmatprep.subr.mxu0 0.0
        %1491 = vmatpush1.msra.mxu0 0.0
        %1492 = vmatprep.subr.mxu0 0.0
        %1493 = vmatpush1.msra.mxu0 0.0
        %1494 = vmatprep.subr.mxu0 0.0
        %1495 = vmatpush1.msra.mxu0 0.0
        %1496 = vmatprep.subr.mxu0 0.0
        %1497 = vmatpush1.msra.mxu0 0.0
        %1498 = vmatprep.subr.mxu0 0.0
        %1499 = vmatpush1.msra.mxu0 0.0
        %1500 = vmatprep.subr.mxu0 0.0
        %1501 = vmatpush1.msra.mxu0 0.0
        %1502 = vmatprep.subr.mxu0 0.0
        %1503 = vmatpush1.msra.mxu0 0.0
        %1504 = vmatprep.subr.mxu0 0.0
        %1505 = vmatpush1.msra.mxu0 0.0
        %1506 = vmatprep.subr.mxu0 0.0
        %1507 = vmatpush1.msra.mxu0 0.0
        %1508 = vmatprep.subr.mxu0 0.0
        %1509 = vmatpush1.msra.mxu0 0.0
        %1510 = vmatprep.subr.mxu0 0.0
        %1511 = vmatpush1.msra.mxu0 0.0
        %1512 = vmatprep.subr.mxu0 0.0
        %1513 = vmatpush1.msra.mxu0 0.0
        %1514 = vmatprep.subr.mxu0 0.0
        %1515 = vmatpush1.msra.mxu0 0.0
        %1516 = vmatprep.subr.mxu0 0.0
        %1517 = vmatpush1.msra.mxu0 0.0
        %1518 = vmatprep.subr.mxu0 0.0
        %1519 = vmatpush1.msra.mxu0 0.0
        %1520 = vmatprep.subr.mxu0 0.0
        %1521 = vmatpush1.msra.mxu0 0.0
        %1522 = vmatprep.subr.mxu0 0.0
        %1523 = vmatpush1.msra.mxu0 0.0
        %1524 = vmatprep.mubr.f32.mxu0 0.0
        %1525 = vmatmul.mubr.f32.gmra.mrb[0].mxu0 %v1279
        %v1526 = vpop.f32.mrb[0].mxu0
        %v1527 = vadd.f32 0.0, %v1526
        %v1528 = vpop.f32.mrb[0].mxu0
        %1529 = vmatprep.mubr.f32.mxu0 0.0
        %1530 = vmatmul.mubr.f32.gmra.mrb[0].mxu0 %v1282
        %v1531 = vpop.f32.mrb[0].mxu0
        %v1532 = vadd.f32 0.0, %v1531
        %v1533 = vpop.f32.mrb[0].mxu0
        %1534 = vmatprep.mubr.f32.mxu0 0.0
        %1535 = vmatmul.mubr.f32.gmra.mrb[0].mxu0 %v1285
        %v1536 = vpop.f32.mrb[0].mxu0
        %v1537 = vadd.f32 0.0, %v1536
        %v1538 = vpop.f32.mrb[0].mxu0
        %1539 = vmatprep.mubr.f32.mxu0 0.0
        %1540 = vmatmul.mubr.f32.gmra.mrb[0].mxu0 %v1288
        %v1541 = vpop.f32.mrb[0].mxu0
        %v1542 = vadd.f32 0.0, %v1541
        %v1543 = vpop.f32.mrb[0].mxu0
        %1544 = vdwg.mxu0
        %1545 = vmatprep.subr.mxu0 0.0
        %1546 = vmatpush1.msra.mxu0 %v1236
        %1547 = vmatprep.subr.mxu0 0.0
        %1548 = vmatpush1.msra.mxu0 %v1239
        %1549 = vmatprep.subr.mxu0 0.0
        %1550 = vmatpush1.msra.mxu0 0.0
        %1551 = vmatprep.subr.mxu0 0.0
        %1552 = vmatpush1.msra.mxu0 0.0
        %1553 = vmatprep.subr.mxu0 0.0
        %1554 = vmatpush1.msra.mxu0 0.0
        %1555 = vmatprep.subr.mxu0 0.0
        %1556 = vmatpush1.msra.mxu0 0.0
        %1557 = vmatprep.subr.mxu0 0.0
        %1558 = vmatpush1.msra.mxu0 0.0
        %1559 = vmatprep.subr.mxu0 0.0
        %1560 = vmatpush1.msra.mxu0 0.0
        %1561 = vmatprep.subr.mxu0 0.0
        %1562 = vmatpush1.msra.mxu0 0.0
        %1563 = vmatprep.subr.mxu0 0.0
        %1564 = vmatpush1.msra.mxu0 0.0
        %1565 = vmatprep.subr.mxu0 0.0
        %1566 = vmatpush1.msra.mxu0 0.0
        %1567 = vmatprep.subr.mxu0 0.0
        %1568 = vmatpush1.msra.mxu0 0.0
        %1569 = vmatprep.subr.mxu0 0.0
        %1570 = vmatpush1.msra.mxu0 0.0
        %1571 = vmatprep.subr.mxu0 0.0
        %1572 = vmatpush1.msra.mxu0 0.0
        %1573 = vmatprep.subr.mxu0 0.0
        %1574 = vmatpush1.msra.mxu0 0.0
        %1575 = vmatprep.subr.mxu0 0.0
        %1576 = vmatpush1.msra.mxu0 0.0
        %1577 = vmatprep.subr.mxu0 0.0
        %1578 = vmatpush1.msra.mxu0 0.0
        %1579 = vmatprep.subr.mxu0 0.0
        %1580 = vmatpush1.msra.mxu0 0.0
        %1581 = vmatprep.subr.mxu0 0.0
        %1582 = vmatpush1.msra.mxu0 0.0
        %1583 = vmatprep.subr.mxu0 0.0
        %1584 = vmatpush1.msra.mxu0 0.0
        %1585 = vmatprep.subr.mxu0 0.0
        %1586 = vmatpush1.msra.mxu0 0.0
        %1587 = vmatprep.subr.mxu0 0.0
        %1588 = vmatpush1.msra.mxu0 0.0
        %1589 = vmatprep.subr.mxu0 0.0
        %1590 = vmatpush1.msra.mxu0 0.0
        %1591 = vmatprep.subr.mxu0 0.0
        %1592 = vmatpush1.msra.mxu0 0.0
        %1593 = vmatprep.subr.mxu0 0.0
        %1594 = vmatpush1.msra.mxu0 0.0
        %1595 = vmatprep.subr.mxu0 0.0
        %1596 = vmatpush1.msra.mxu0 0.0
        %1597 = vmatprep.subr.mxu0 0.0
        %1598 = vmatpush1.msra.mxu0 0.0
        %1599 = vmatprep.subr.mxu0 0.0
        %1600 = vmatpush1.msra.mxu0 0.0
        %1601 = vmatprep.subr.mxu0 0.0
        %1602 = vmatpush1.msra.mxu0 0.0
        %1603 = vmatprep.subr.mxu0 0.0
        %1604 = vmatpush1.msra.mxu0 0.0
        %1605 = vmatprep.subr.mxu0 0.0
        %1606 = vmatpush1.msra.mxu0 0.0
        %1607 = vmatprep.subr.mxu0 0.0
        %1608 = vmatpush1.msra.mxu0 0.0
        %1609 = vmatprep.mubr.f32.mxu0 0.0
        %1610 = vmatmul.mubr.f32.gmra.mrb[0].mxu0 %v1279
        %v1611 = vpop.f32.mrb[0].mxu0
        %v1612 = vadd.f32 0.0, %v1611
        %v1613 = vpop.f32.mrb[0].mxu0
        %1614 = vmatprep.mubr.f32.mxu0 0.0
        %1615 = vmatmul.mubr.f32.gmra.mrb[0].mxu0 %v1282
        %v1616 = vpop.f32.mrb[0].mxu0
        %v1617 = vadd.f32 0.0, %v1616
        %v1618 = vpop.f32.mrb[0].mxu0
        %1619 = vmatprep.mubr.f32.mxu0 0.0
        %1620 = vmatmul.mubr.f32.gmra.mrb[0].mxu0 %v1285
        %v1621 = vpop.f32.mrb[0].mxu0
        %v1622 = vadd.f32 0.0, %v1621
        %v1623 = vpop.f32.mrb[0].mxu0
        %1624 = vmatprep.mubr.f32.mxu0 0.0
        %1625 = vmatmul.mubr.f32.gmra.mrb[0].mxu0 %v1288
        %v1626 = vpop.f32.mrb[0].mxu0
        %v1627 = vadd.f32 0.0, %v1626
        %v1628 = vpop.f32.mrb[0].mxu0
        %1629 = vdwg.mxu0
        %1630 = vmatprep.subr.mxu0 0.0
        %1631 = vmatpush1.msra.mxu0 %v1244
        %1632 = vmatprep.subr.mxu0 0.0
        %1633 = vmatpush1.msra.mxu0 %v1247
        %1634 = vmatprep.subr.mxu0 0.0
        %1635 = vmatpush1.msra.mxu0 0.0
        %1636 = vmatprep.subr.mxu0 0.0
        %1637 = vmatpush1.msra.mxu0 0.0
        %1638 = vmatprep.subr.mxu0 0.0
        %1639 = vmatpush1.msra.mxu0 0.0
        %1640 = vmatprep.subr.mxu0 0.0
        %1641 = vmatpush1.msra.mxu0 0.0
        %1642 = vmatprep.subr.mxu0 0.0
        %1643 = vmatpush1.msra.mxu0 0.0
        %1644 = vmatprep.subr.mxu0 0.0
        %1645 = vmatpush1.msra.mxu0 0.0
        %1646 = vmatprep.subr.mxu0 0.0
        %1647 = vmatpush1.msra.mxu0 0.0
        %1648 = vmatprep.subr.mxu0 0.0
        %1649 = vmatpush1.msra.mxu0 0.0
        %1650 = vmatprep.subr.mxu0 0.0
        %1651 = vmatpush1.msra.mxu0 0.0
        %1652 = vmatprep.subr.mxu0 0.0
        %1653 = vmatpush1.msra.mxu0 0.0
        %1654 = vmatprep.subr.mxu0 0.0
        %1655 = vmatpush1.msra.mxu0 0.0
        %1656 = vmatprep.subr.mxu0 0.0
        %1657 = vmatpush1.msra.mxu0 0.0
        %1658 = vmatprep.subr.mxu0 0.0
        %1659 = vmatpush1.msra.mxu0 0.0
        %1660 = vmatprep.subr.mxu0 0.0
        %1661 = vmatpush1.msra.mxu0 0.0
        %1662 = vmatprep.subr.mxu0 0.0
        %1663 = vmatpush1.msra.mxu0 0.0
        %1664 = vmatprep.subr.mxu0 0.0
        %1665 = vmatpush1.msra.mxu0 0.0
        %1666 = vmatprep.subr.mxu0 0.0
        %1667 = vmatpush1.msra.mxu0 0.0
        %1668 = vmatprep.subr.mxu0 0.0
        %1669 = vmatpush1.msra.mxu0 0.0
        %1670 = vmatprep.subr.mxu0 0.0
        %1671 = vmatpush1.msra.mxu0 0.0
        %1672 = vmatprep.subr.mxu0 0.0
        %1673 = vmatpush1.msra.mxu0 0.0
        %1674 = vmatprep.subr.mxu0 0.0
        %1675 = vmatpush1.msra.mxu0 0.0
        %1676 = vmatprep.subr.mxu0 0.0
        %1677 = vmatpush1.msra.mxu0 0.0
        %1678 = vmatprep.subr.mxu0 0.0
        %1679 = vmatpush1.msra.mxu0 0.0
        %1680 = vmatprep.subr.mxu0 0.0
        %1681 = vmatpush1.msra.mxu0 0.0
        %1682 = vmatprep.subr.mxu0 0.0
        %1683 = vmatpush1.msra.mxu0 0.0
        %1684 = vmatprep.subr.mxu0 0.0
        %1685 = vmatpush1.msra.mxu0 0.0
        %1686 = vmatprep.subr.mxu0 0.0
        %1687 = vmatpush1.msra.mxu0 0.0
        %1688 = vmatprep.subr.mxu0 0.0
        %1689 = vmatpush1.msra.mxu0 0.0
        %1690 = vmatprep.subr.mxu0 0.0
        %1691 = vmatpush1.msra.mxu0 0.0
        %1692 = vmatprep.subr.mxu0 0.0
        %1693 = vmatpush1.msra.mxu0 0.0
        %1694 = vmatprep.mubr.f32.mxu0 0.0
        %1695 = vmatmul.mubr.f32.gmra.mrb[0].mxu0 %v1279
        %v1696 = vpop.f32.mrb[0].mxu0
        %v1697 = vadd.f32 0.0, %v1696
        %v1698 = vpop.f32.mrb[0].mxu0
        %1699 = vmatprep.mubr.f32.mxu0 0.0
        %1700 = vmatmul.mubr.f32.gmra.mrb[0].mxu0 %v1282
        %v1701 = vpop.f32.mrb[0].mxu0
        %v1702 = vadd.f32 0.0, %v1701
        %v1703 = vpop.f32.mrb[0].mxu0
        %1704 = vmatprep.mubr.f32.mxu0 0.0
        %1705 = vmatmul.mubr.f32.gmra.mrb[0].mxu0 %v1285
        %v1706 = vpop.f32.mrb[0].mxu0
        %v1707 = vadd.f32 0.0, %v1706
        %v1708 = vpop.f32.mrb[0].mxu0
        %1709 = vmatprep.mubr.f32.mxu0 0.0
        %1710 = vmatmul.mubr.f32.gmra.mrb[0].mxu0 %v1288
        %v1711 = vpop.f32.mrb[0].mxu0
        %v1712 = vadd.f32 0.0, %v1711
        %v1713 = vpop.f32.mrb[0].mxu0
        %1714 = vdwg.mxu0
        %1715 = vmatprep.subr.mxu0 0.0
        %1716 = vmatpush1.msra.mxu0 %v1252
        %1717 = vmatprep.subr.mxu0 0.0
        %1718 = vmatpush1.msra.mxu0 %v1255
        %1719 = vmatprep.subr.mxu0 0.0
        %1720 = vmatpush1.msra.mxu0 0.0
        %1721 = vmatprep.subr.mxu0 0.0
        %1722 = vmatpush1.msra.mxu0 0.0
        %1723 = vmatprep.subr.mxu0 0.0
        %1724 = vmatpush1.msra.mxu0 0.0
        %1725 = vmatprep.subr.mxu0 0.0
        %1726 = vmatpush1.msra.mxu0 0.0
        %1727 = vmatprep.subr.mxu0 0.0
        %1728 = vmatpush1.msra.mxu0 0.0
        %1729 = vmatprep.subr.mxu0 0.0
        %1730 = vmatpush1.msra.mxu0 0.0
        %1731 = vmatprep.subr.mxu0 0.0
        %1732 = vmatpush1.msra.mxu0 0.0
        %1733 = vmatprep.subr.mxu0 0.0
        %1734 = vmatpush1.msra.mxu0 0.0
        %1735 = vmatprep.subr.mxu0 0.0
        %1736 = vmatpush1.msra.mxu0 0.0
        %1737 = vmatprep.subr.mxu0 0.0
        %1738 = vmatpush1.msra.mxu0 0.0
        %1739 = vmatprep.subr.mxu0 0.0
        %1740 = vmatpush1.msra.mxu0 0.0
        %1741 = vmatprep.subr.mxu0 0.0
        %1742 = vmatpush1.msra.mxu0 0.0
        %1743 = vmatprep.subr.mxu0 0.0
        %1744 = vmatpush1.msra.mxu0 0.0
        %1745 = vmatprep.subr.mxu0 0.0
        %1746 = vmatpush1.msra.mxu0 0.0
        %1747 = vmatprep.subr.mxu0 0.0
        %1748 = vmatpush1.msra.mxu0 0.0
        %1749 = vmatprep.subr.mxu0 0.0
        %1750 = vmatpush1.msra.mxu0 0.0
        %1751 = vmatprep.subr.mxu0 0.0
        %1752 = vmatpush1.msra.mxu0 0.0
        %1753 = vmatprep.subr.mxu0 0.0
        %1754 = vmatpush1.msra.mxu0 0.0
        %1755 = vmatprep.subr.mxu0 0.0
        %1756 = vmatpush1.msra.mxu0 0.0
        %1757 = vmatprep.subr.mxu0 0.0
        %1758 = vmatpush1.msra.mxu0 0.0
        %1759 = vmatprep.subr.mxu0 0.0
        %1760 = vmatpush1.msra.mxu0 0.0
        %1761 = vmatprep.subr.mxu0 0.0
        %1762 = vmatpush1.msra.mxu0 0.0
        %1763 = vmatprep.subr.mxu0 0.0
        %1764 = vmatpush1.msra.mxu0 0.0
        %1765 = vmatprep.subr.mxu0 0.0
        %1766 = vmatpush1.msra.mxu0 0.0
        %1767 = vmatprep.subr.mxu0 0.0
        %1768 = vmatpush1.msra.mxu0 0.0
        %1769 = vmatprep.subr.mxu0 0.0
        %1770 = vmatpush1.msra.mxu0 0.0
        %1771 = vmatprep.subr.mxu0 0.0
        %1772 = vmatpush1.msra.mxu0 0.0
        %1773 = vmatprep.subr.mxu0 0.0
        %1774 = vmatpush1.msra.mxu0 0.0
        %1775 = vmatprep.subr.mxu0 0.0
        %1776 = vmatpush1.msra.mxu0 0.0
        %1777 = vmatprep.subr.mxu0 0.0
        %1778 = vmatpush1.msra.mxu0 0.0
        %1779 = vmatprep.mubr.f32.mxu0 0.0
        %1780 = vmatmul.mubr.f32.gmra.mrb[0].mxu0 %v1279
        %v1781 = vpop.f32.mrb[0].mxu0
        %v1782 = vadd.f32 0.0, %v1781
        %v1783 = vpop.f32.mrb[0].mxu0
        %1784 = vmatprep.mubr.f32.mxu0 0.0
        %1785 = vmatmul.mubr.f32.gmra.mrb[0].mxu0 %v1282
        %v1786 = vpop.f32.mrb[0].mxu0
        %v1787 = vadd.f32 0.0, %v1786
        %v1788 = vpop.f32.mrb[0].mxu0
        %1789 = vmatprep.mubr.f32.mxu0 0.0
        %1790 = vmatmul.mubr.f32.gmra.mrb[0].mxu0 %v1285
        %v1791 = vpop.f32.mrb[0].mxu0
        %v1792 = vadd.f32 0.0, %v1791
        %v1793 = vpop.f32.mrb[0].mxu0
        %1794 = vmatprep.mubr.f32.mxu0 0.0
        %1795 = vmatmul.mubr.f32.gmra.mrb[0].mxu0 %v1288
        %v1796 = vpop.f32.mrb[0].mxu0
        %v1797 = vadd.f32 0.0, %v1796
        %v1798 = vpop.f32.mrb[0].mxu0
        %1799 = vdwg.mxu0
        %1800 = vmatprep.subr.mxu0 0.0
        %1801 = vmatpush1.msra.mxu0 %v1260
        %1802 = vmatprep.subr.mxu0 0.0
        %1803 = vmatpush1.msra.mxu0 %v1263
        %1804 = vmatprep.subr.mxu0 0.0
        %1805 = vmatpush1.msra.mxu0 0.0
        %1806 = vmatprep.subr.mxu0 0.0
        %1807 = vmatpush1.msra.mxu0 0.0
        %1808 = vmatprep.subr.mxu0 0.0
        %1809 = vmatpush1.msra.mxu0 0.0
        %1810 = vmatprep.subr.mxu0 0.0
        %1811 = vmatpush1.msra.mxu0 0.0
        %1812 = vmatprep.subr.mxu0 0.0
        %1813 = vmatpush1.msra.mxu0 0.0
        %1814 = vmatprep.subr.mxu0 0.0
        %1815 = vmatpush1.msra.mxu0 0.0
        %1816 = vmatprep.subr.mxu0 0.0
        %1817 = vmatpush1.msra.mxu0 0.0
        %1818 = vmatprep.subr.mxu0 0.0
        %1819 = vmatpush1.msra.mxu0 0.0
        %1820 = vmatprep.subr.mxu0 0.0
        %1821 = vmatpush1.msra.mxu0 0.0
        %1822 = vmatprep.subr.mxu0 0.0
        %1823 = vmatpush1.msra.mxu0 0.0
        %1824 = vmatprep.subr.mxu0 0.0
        %1825 = vmatpush1.msra.mxu0 0.0
        %1826 = vmatprep.subr.mxu0 0.0
        %1827 = vmatpush1.msra.mxu0 0.0
        %1828 = vmatprep.subr.mxu0 0.0
        %1829 = vmatpush1.msra.mxu0 0.0
        %1830 = vmatprep.subr.mxu0 0.0
        %1831 = vmatpush1.msra.mxu0 0.0
        %1832 = vmatprep.subr.mxu0 0.0
        %1833 = vmatpush1.msra.mxu0 0.0
        %1834 = vmatprep.subr.mxu0 0.0
        %1835 = vmatpush1.msra.mxu0 0.0
        %1836 = vmatprep.subr.mxu0 0.0
        %1837 = vmatpush1.msra.mxu0 0.0
        %1838 = vmatprep.subr.mxu0 0.0
        %1839 = vmatpush1.msra.mxu0 0.0
        %1840 = vmatprep.subr.mxu0 0.0
        %1841 = vmatpush1.msra.mxu0 0.0
        %1842 = vmatprep.subr.mxu0 0.0
        %1843 = vmatpush1.msra.mxu0 0.0
        %1844 = vmatprep.subr.mxu0 0.0
        %1845 = vmatpush1.msra.mxu0 0.0
        %1846 = vmatprep.subr.mxu0 0.0
        %1847 = vmatpush1.msra.mxu0 0.0
        %1848 = vmatprep.subr.mxu0 0.0
        %1849 = vmatpush1.msra.mxu0 0.0
        %1850 = vmatprep.subr.mxu0 0.0
        %1851 = vmatpush1.msra.mxu0 0.0
        %1852 = vmatprep.subr.mxu0 0.0
        %1853 = vmatpush1.msra.mxu0 0.0
        %1854 = vmatprep.subr.mxu0 0.0
        %1855 = vmatpush1.msra.mxu0 0.0
        %1856 = vmatprep.subr.mxu0 0.0
        %1857 = vmatpush1.msra.mxu0 0.0
        %1858 = vmatprep.subr.mxu0 0.0
        %1859 = vmatpush1.msra.mxu0 0.0
        %1860 = vmatprep.subr.mxu0 0.0
        %1861 = vmatpush1.msra.mxu0 0.0
        %1862 = vmatprep.subr.mxu0 0.0
        %1863 = vmatpush1.msra.mxu0 0.0
        %1864 = vmatprep.mubr.f32.mxu0 0.0
        %1865 = vmatmul.mubr.f32.gmra.mrb[0].mxu0 %v1279
        %v1866 = vpop.f32.mrb[0].mxu0
        %v1867 = vadd.f32 0.0, %v1866
        %v1868 = vpop.f32.mrb[0].mxu0
        %1869 = vmatprep.mubr.f32.mxu0 0.0
        %1870 = vmatmul.mubr.f32.gmra.mrb[0].mxu0 %v1282
        %v1871 = vpop.f32.mrb[0].mxu0
        %v1872 = vadd.f32 0.0, %v1871
        %v1873 = vpop.f32.mrb[0].mxu0
        %1874 = vmatprep.mubr.f32.mxu0 0.0
        %1875 = vmatmul.mubr.f32.gmra.mrb[0].mxu0 %v1285
        %v1876 = vpop.f32.mrb[0].mxu0
        %v1877 = vadd.f32 0.0, %v1876
        %v1878 = vpop.f32.mrb[0].mxu0
        %1879 = vmatprep.mubr.f32.mxu0 0.0
        %1880 = vmatmul.mubr.f32.gmra.mrb[0].mxu0 %v1288
        %v1881 = vpop.f32.mrb[0].mxu0
        %v1882 = vadd.f32 0.0, %v1881
        %v1883 = vpop.f32.mrb[0].mxu0
        %1884 = vdwg.mxu0
        %1885 = vmatprep.subr.mxu0 0.0
        %1886 = vmatpush1.msra.mxu0 %v1268
        %1887 = vmatprep.subr.mxu0 0.0
        %1888 = vmatpush1.msra.mxu0 %v1271
        %1889 = vmatprep.subr.mxu0 0.0
        %1890 = vmatpush1.msra.mxu0 0.0
        %1891 = vmatprep.subr.mxu0 0.0
        %1892 = vmatpush1.msra.mxu0 0.0
        %1893 = vmatprep.subr.mxu0 0.0
        %1894 = vmatpush1.msra.mxu0 0.0
        %1895 = vmatprep.subr.mxu0 0.0
        %1896 = vmatpush1.msra.mxu0 0.0
        %1897 = vmatprep.subr.mxu0 0.0
        %1898 = vmatpush1.msra.mxu0 0.0
        %1899 = vmatprep.subr.mxu0 0.0
        %1900 = vmatpush1.msra.mxu0 0.0
        %1901 = vmatprep.subr.mxu0 0.0
        %1902 = vmatpush1.msra.mxu0 0.0
        %1903 = vmatprep.subr.mxu0 0.0
        %1904 = vmatpush1.msra.mxu0 0.0
        %1905 = vmatprep.subr.mxu0 0.0
        %1906 = vmatpush1.msra.mxu0 0.0
        %1907 = vmatprep.subr.mxu0 0.0
        %1908 = vmatpush1.msra.mxu0 0.0
        %1909 = vmatprep.subr.mxu0 0.0
        %1910 = vmatpush1.msra.mxu0 0.0
        %1911 = vmatprep.subr.mxu0 0.0
        %1912 = vmatpush1.msra.mxu0 0.0
        %1913 = vmatprep.subr.mxu0 0.0
        %1914 = vmatpush1.msra.mxu0 0.0
        %1915 = vmatprep.subr.mxu0 0.0
        %1916 = vmatpush1.msra.mxu0 0.0
        %1917 = vmatprep.subr.mxu0 0.0
        %1918 = vmatpush1.msra.mxu0 0.0
        %1919 = vmatprep.subr.mxu0 0.0
        %1920 = vmatpush1.msra.mxu0 0.0
        %1921 = vmatprep.subr.mxu0 0.0
        %1922 = vmatpush1.msra.mxu0 0.0
        %1923 = vmatprep.subr.mxu0 0.0
        %1924 = vmatpush1.msra.mxu0 0.0
        %1925 = vmatprep.subr.mxu0 0.0
        %1926 = vmatpush1.msra.mxu0 0.0
        %1927 = vmatprep.subr.mxu0 0.0
        %1928 = vmatpush1.msra.mxu0 0.0
        %1929 = vmatprep.subr.mxu0 0.0
        %1930 = vmatpush1.msra.mxu0 0.0
        %1931 = vmatprep.subr.mxu0 0.0
        %1932 = vmatpush1.msra.mxu0 0.0
        %1933 = vmatprep.subr.mxu0 0.0
        %1934 = vmatpush1.msra.mxu0 0.0
        %1935 = vmatprep.subr.mxu0 0.0
        %1936 = vmatpush1.msra.mxu0 0.0
        %1937 = vmatprep.subr.mxu0 0.0
        %1938 = vmatpush1.msra.mxu0 0.0
        %1939 = vmatprep.subr.mxu0 0.0
        %1940 = vmatpush1.msra.mxu0 0.0
        %1941 = vmatprep.subr.mxu0 0.0
        %1942 = vmatpush1.msra.mxu0 0.0
        %1943 = vmatprep.subr.mxu0 0.0
        %1944 = vmatpush1.msra.mxu0 0.0
        %1945 = vmatprep.subr.mxu0 0.0
        %1946 = vmatpush1.msra.mxu0 0.0
        %1947 = vmatprep.subr.mxu0 0.0
        %1948 = vmatpush1.msra.mxu0 0.0
        %1949 = vmatprep.mubr.f32.mxu0 0.0
        %1950 = vmatmul.mubr.f32.gmra.mrb[0].mxu0 %v1279
        %v1951 = vpop.f32.mrb[0].mxu0
        %v1952 = vadd.f32 0.0, %v1951
        %v1953 = vpop.f32.mrb[0].mxu0
        %1954 = vmatprep.mubr.f32.mxu0 0.0
        %1955 = vmatmul.mubr.f32.gmra.mrb[0].mxu0 %v1282
        %v1956 = vpop.f32.mrb[0].mxu0
        %v1957 = vadd.f32 0.0, %v1956
        %v1958 = vpop.f32.mrb[0].mxu0
        %1959 = vmatprep.mubr.f32.mxu0 0.0
        %1960 = vmatmul.mubr.f32.gmra.mrb[0].mxu0 %v1285
        %v1961 = vpop.f32.mrb[0].mxu0
        %v1962 = vadd.f32 0.0, %v1961
        %v1963 = vpop.f32.mrb[0].mxu0
        %1964 = vmatprep.mubr.f32.mxu0 0.0
        %1965 = vmatmul.mubr.f32.gmra.mrb[0].mxu0 %v1288
        %v1966 = vpop.f32.mrb[0].mxu0
        %v1967 = vadd.f32 0.0, %v1966
        %v1968 = vpop.f32.mrb[0].mxu0
        %1969 = vdwg.mxu0
        %v1970 = vcombine.low %v1357, %v1527
        %v1971 = vcombine.high %v1357, %v1527
        %v1973 = vunpack.c.l.s4 1983009808
        %v1974 = vunpack.c.0.s8 %v1973
        %v1975 = vlaneseq
        %v1976 = vshrl.u32 %v1975, 7
        %v1977 = vsub.s32 %v1974, %v1976
        %v1978 = vrot.slane %v1970, %v1977
        %v1980 = vunpack.c.l.s4 1983009808
        %v1981 = vunpack.c.0.s8 %v1980
        %v1982 = vlaneseq
        %v1983 = vshrl.u32 %v1982, 7
        %v1984 = vsub.s32 %v1981, %v1983
        %v1985 = vrot.slane %v1971, %v1984
        %v1986 = vcombine.low %v1442, %v1612
        %v1987 = vcombine.high %v1442, %v1612
        %v1989 = vunpack.c.l.s4 1983009808
        %v1990 = vunpack.c.0.s8 %v1989
        %v1991 = vlaneseq
        %v1992 = vshrl.u32 %v1991, 7
        %v1993 = vsub.s32 %v1990, %v1992
        %v1994 = vrot.slane %v1986, %v1993
        %v1996 = vunpack.c.l.s4 1983009808
        %v1997 = vunpack.c.0.s8 %v1996
        %v1998 = vlaneseq
        %v1999 = vshrl.u32 %v1998, 7
        %v2000 = vsub.s32 %v1997, %v1999
        %v2001 = vrot.slane %v1987, %v2000
        %v2002 = vcombine.low %v1697, %v1867
        %v2003 = vcombine.high %v1697, %v1867
        %v2005 = vunpack.c.l.s4 1983009808
        %v2006 = vunpack.c.0.s8 %v2005
        %v2007 = vlaneseq
        %v2008 = vshrl.u32 %v2007, 7
        %v2009 = vsub.s32 %v2006, %v2008
        %v2010 = vrot.slane %v2002, %v2009
        %v2012 = vunpack.c.l.s4 1983009808
        %v2013 = vunpack.c.0.s8 %v2012
        %v2014 = vlaneseq
        %v2015 = vshrl.u32 %v2014, 7
        %v2016 = vsub.s32 %v2013, %v2015
        %v2017 = vrot.slane %v2003, %v2016
        %v2018 = vcombine.low %v1782, %v1952
        %v2019 = vcombine.high %v1782, %v1952
        %v2021 = vunpack.c.l.s4 1983009808
        %v2022 = vunpack.c.0.s8 %v2021
        %v2023 = vlaneseq
        %v2024 = vshrl.u32 %v2023, 7
        %v2025 = vsub.s32 %v2022, %v2024
        %v2026 = vrot.slane %v2018, %v2025
        %v2028 = vunpack.c.l.s4 1983009808
        %v2029 = vunpack.c.0.s8 %v2028
        %v2030 = vlaneseq
        %v2031 = vshrl.u32 %v2030, 7
        %v2032 = vsub.s32 %v2029, %v2031
        %v2033 = vrot.slane %v2019, %v2032
        %v2034 = vcombine.low %v1978, %v1994
        %v2035 = vcombine.high %v1978, %v1994
        %v2037 = vunpack.c.l.s4 1934713408
        %v2038 = vunpack.c.0.s8 %v2037
        %v2039 = vlaneseq
        %v2040 = vshrl.u32 %v2039, 7
        %v2041 = vsub.s32 %v2038, %v2040
        %v2042 = vrot.slane %v2034, %v2041
        %v2044 = vunpack.c.l.s4 1934713408
        %v2045 = vunpack.c.0.s8 %v2044
        %v2046 = vlaneseq
        %v2047 = vshrl.u32 %v2046, 7
        %v2048 = vsub.s32 %v2045, %v2047
        %v2049 = vrot.slane %v2035, %v2048
        %v2050 = vcombine.low %v1985, %v2001
        %v2051 = vcombine.high %v1985, %v2001
        %v2053 = vunpack.c.l.s4 1934713408
        %v2054 = vunpack.c.0.s8 %v2053
        %v2055 = vlaneseq
        %v2056 = vshrl.u32 %v2055, 7
        %v2057 = vsub.s32 %v2054, %v2056
        %v2058 = vrot.slane %v2050, %v2057
        %v2060 = vunpack.c.l.s4 1934713408
        %v2061 = vunpack.c.0.s8 %v2060
        %v2062 = vlaneseq
        %v2063 = vshrl.u32 %v2062, 7
        %v2064 = vsub.s32 %v2061, %v2063
        %v2065 = vrot.slane %v2051, %v2064
        %v2066 = vcombine.low %v2010, %v2026
        %v2067 = vcombine.high %v2010, %v2026
        %v2069 = vunpack.c.l.s4 1934713408
        %v2070 = vunpack.c.0.s8 %v2069
        %v2071 = vlaneseq
        %v2072 = vshrl.u32 %v2071, 7
        %v2073 = vsub.s32 %v2070, %v2072
        %v2074 = vrot.slane %v2066, %v2073
        %v2076 = vunpack.c.l.s4 1934713408
        %v2077 = vunpack.c.0.s8 %v2076
        %v2078 = vlaneseq
        %v2079 = vshrl.u32 %v2078, 7
        %v2080 = vsub.s32 %v2077, %v2079
        %v2081 = vrot.slane %v2067, %v2080
        %v2082 = vcombine.low %v2017, %v2033
        %v2083 = vcombine.high %v2017, %v2033
        %v2085 = vunpack.c.l.s4 1934713408
        %v2086 = vunpack.c.0.s8 %v2085
        %v2087 = vlaneseq
        %v2088 = vshrl.u32 %v2087, 7
        %v2089 = vsub.s32 %v2086, %v2088
        %v2090 = vrot.slane %v2082, %v2089
        %v2092 = vunpack.c.l.s4 1934713408
        %v2093 = vunpack.c.0.s8 %v2092
        %v2094 = vlaneseq
        %v2095 = vshrl.u32 %v2094, 7
        %v2096 = vsub.s32 %v2093, %v2095
        %v2097 = vrot.slane %v2083, %v2096
        %v2098 = vcombine.low %v2042, %v2074
        %v2099 = vcombine.high %v2042, %v2074
        %v2100 = vcombine.low %v2049, %v2081
        %v2101 = vcombine.high %v2049, %v2081
        %v2102 = vcombine.low %v2058, %v2090
        %v2103 = vcombine.high %v2058, %v2090
        %v2104 = vcombine.low %v2065, %v2097
        %v2105 = vcombine.high %v2065, %v2097
        %v2106 = vcombine.low %v1362, %v1532
        %v2107 = vcombine.high %v1362, %v1532
        %v2109 = vunpack.c.l.s4 1983009808
        %v2110 = vunpack.c.0.s8 %v2109
        %v2111 = vlaneseq
        %v2112 = vshrl.u32 %v2111, 7
        %v2113 = vsub.s32 %v2110, %v2112
        %v2114 = vrot.slane %v2106, %v2113
        %v2116 = vunpack.c.l.s4 1983009808
        %v2117 = vunpack.c.0.s8 %v2116
        %v2118 = vlaneseq
        %v2119 = vshrl.u32 %v2118, 7
        %v2120 = vsub.s32 %v2117, %v2119
        %v2121 = vrot.slane %v2107, %v2120
        %v2122 = vcombine.low %v1447, %v1617
        %v2123 = vcombine.high %v1447, %v1617
        %v2125 = vunpack.c.l.s4 1983009808
        %v2126 = vunpack.c.0.s8 %v2125
        %v2127 = vlaneseq
        %v2128 = vshrl.u32 %v2127, 7
        %v2129 = vsub.s32 %v2126, %v2128
        %v2130 = vrot.slane %v2122, %v2129
        %v2132 = vunpack.c.l.s4 1983009808
        %v2133 = vunpack.c.0.s8 %v2132
        %v2134 = vlaneseq
        %v2135 = vshrl.u32 %v2134, 7
        %v2136 = vsub.s32 %v2133, %v2135
        %v2137 = vrot.slane %v2123, %v2136
        %v2138 = vcombine.low %v1702, %v1872
        %v2139 = vcombine.high %v1702, %v1872
        %v2141 = vunpack.c.l.s4 1983009808
        %v2142 = vunpack.c.0.s8 %v2141
        %v2143 = vlaneseq
        %v2144 = vshrl.u32 %v2143, 7
        %v2145 = vsub.s32 %v2142, %v2144
        %v2146 = vrot.slane %v2138, %v2145
        %v2148 = vunpack.c.l.s4 1983009808
        %v2149 = vunpack.c.0.s8 %v2148
        %v2150 = vlaneseq
        %v2151 = vshrl.u32 %v2150, 7
        %v2152 = vsub.s32 %v2149, %v2151
        %v2153 = vrot.slane %v2139, %v2152
        %v2154 = vcombine.low %v1787, %v1957
        %v2155 = vcombine.high %v1787, %v1957
        %v2157 = vunpack.c.l.s4 1983009808
        %v2158 = vunpack.c.0.s8 %v2157
        %v2159 = vlaneseq
        %v2160 = vshrl.u32 %v2159, 7
        %v2161 = vsub.s32 %v2158, %v2160
        %v2162 = vrot.slane %v2154, %v2161
        %v2164 = vunpack.c.l.s4 1983009808
        %v2165 = vunpack.c.0.s8 %v2164
        %v2166 = vlaneseq
        %v2167 = vshrl.u32 %v2166, 7
        %v2168 = vsub.s32 %v2165, %v2167
        %v2169 = vrot.slane %v2155, %v2168
        %v2170 = vcombine.low %v2114, %v2130
        %v2171 = vcombine.high %v2114, %v2130
        %v2173 = vunpack.c.l.s4 1934713408
        %v2174 = vunpack.c.0.s8 %v2173
        %v2175 = vlaneseq
        %v2176 = vshrl.u32 %v2175, 7
        %v2177 = vsub.s32 %v2174, %v2176
        %v2178 = vrot.slane %v2170, %v2177
        %v2180 = vunpack.c.l.s4 1934713408
        %v2181 = vunpack.c.0.s8 %v2180
        %v2182 = vlaneseq
        %v2183 = vshrl.u32 %v2182, 7
        %v2184 = vsub.s32 %v2181, %v2183
        %v2185 = vrot.slane %v2171, %v2184
        %v2186 = vcombine.low %v2121, %v2137
        %v2187 = vcombine.high %v2121, %v2137
        %v2189 = vunpack.c.l.s4 1934713408
        %v2190 = vunpack.c.0.s8 %v2189
        %v2191 = vlaneseq
        %v2192 = vshrl.u32 %v2191, 7
        %v2193 = vsub.s32 %v2190, %v2192
        %v2194 = vrot.slane %v2186, %v2193
        %v2196 = vunpack.c.l.s4 1934713408
        %v2197 = vunpack.c.0.s8 %v2196
        %v2198 = vlaneseq
        %v2199 = vshrl.u32 %v2198, 7
        %v2200 = vsub.s32 %v2197, %v2199
        %v2201 = vrot.slane %v2187, %v2200
        %v2202 = vcombine.low %v2146, %v2162
        %v2203 = vcombine.high %v2146, %v2162
        %v2205 = vunpack.c.l.s4 1934713408
        %v2206 = vunpack.c.0.s8 %v2205
        %v2207 = vlaneseq
        %v2208 = vshrl.u32 %v2207, 7
        %v2209 = vsub.s32 %v2206, %v2208
        %v2210 = vrot.slane %v2202, %v2209
        %v2212 = vunpack.c.l.s4 1934713408
        %v2213 = vunpack.c.0.s8 %v2212
        %v2214 = vlaneseq
        %v2215 = vshrl.u32 %v2214, 7
        %v2216 = vsub.s32 %v2213, %v2215
        %v2217 = vrot.slane %v2203, %v2216
        %v2218 = vcombine.low %v2153, %v2169
        %v2219 = vcombine.high %v2153, %v2169
        %v2221 = vunpack.c.l.s4 1934713408
        %v2222 = vunpack.c.0.s8 %v2221
        %v2223 = vlaneseq
        %v2224 = vshrl.u32 %v2223, 7
        %v2225 = vsub.s32 %v2222, %v2224
        %v2226 = vrot.slane %v2218, %v2225
        %v2228 = vunpack.c.l.s4 1934713408
        %v2229 = vunpack.c.0.s8 %v2228
        %v2230 = vlaneseq
        %v2231 = vshrl.u32 %v2230, 7
        %v2232 = vsub.s32 %v2229, %v2231
        %v2233 = vrot.slane %v2219, %v2232
        %v2234 = vcombine.low %v2178, %v2210
        %v2235 = vcombine.high %v2178, %v2210
        %v2236 = vcombine.low %v2185, %v2217
        %v2237 = vcombine.high %v2185, %v2217
        %v2238 = vcombine.low %v2194, %v2226
        %v2239 = vcombine.high %v2194, %v2226
        %v2240 = vcombine.low %v2201, %v2233
        %v2241 = vcombine.high %v2201, %v2233
        %v2242 = vcombine.low %v1367, %v1537
        %v2243 = vcombine.high %v1367, %v1537
        %v2245 = vunpack.c.l.s4 1983009808
        %v2246 = vunpack.c.0.s8 %v2245
        %v2247 = vlaneseq
        %v2248 = vshrl.u32 %v2247, 7
        %v2249 = vsub.s32 %v2246, %v2248
        %v2250 = vrot.slane %v2242, %v2249
        %v2252 = vunpack.c.l.s4 1983009808
        %v2253 = vunpack.c.0.s8 %v2252
        %v2254 = vlaneseq
        %v2255 = vshrl.u32 %v2254, 7
        %v2256 = vsub.s32 %v2253, %v2255
        %v2257 = vrot.slane %v2243, %v2256
        %v2258 = vcombine.low %v1452, %v1622
        %v2259 = vcombine.high %v1452, %v1622
        %v2261 = vunpack.c.l.s4 1983009808
        %v2262 = vunpack.c.0.s8 %v2261
        %v2263 = vlaneseq
        %v2264 = vshrl.u32 %v2263, 7
        %v2265 = vsub.s32 %v2262, %v2264
        %v2266 = vrot.slane %v2258, %v2265
        %v2268 = vunpack.c.l.s4 1983009808
        %v2269 = vunpack.c.0.s8 %v2268
        %v2270 = vlaneseq
        %v2271 = vshrl.u32 %v2270, 7
        %v2272 = vsub.s32 %v2269, %v2271
        %v2273 = vrot.slane %v2259, %v2272
        %v2274 = vcombine.low %v1707, %v1877
        %v2275 = vcombine.high %v1707, %v1877
        %v2277 = vunpack.c.l.s4 1983009808
        %v2278 = vunpack.c.0.s8 %v2277
        %v2279 = vlaneseq
        %v2280 = vshrl.u32 %v2279, 7
        %v2281 = vsub.s32 %v2278, %v2280
        %v2282 = vrot.slane %v2274, %v2281
        %v2284 = vunpack.c.l.s4 1983009808
        %v2285 = vunpack.c.0.s8 %v2284
        %v2286 = vlaneseq
        %v2287 = vshrl.u32 %v2286, 7
        %v2288 = vsub.s32 %v2285, %v2287
        %v2289 = vrot.slane %v2275, %v2288
        %v2290 = vcombine.low %v1792, %v1962
        %v2291 = vcombine.high %v1792, %v1962
        %v2293 = vunpack.c.l.s4 1983009808
        %v2294 = vunpack.c.0.s8 %v2293
        %v2295 = vlaneseq
        %v2296 = vshrl.u32 %v2295, 7
        %v2297 = vsub.s32 %v2294, %v2296
        %v2298 = vrot.slane %v2290, %v2297
        %v2300 = vunpack.c.l.s4 1983009808
        %v2301 = vunpack.c.0.s8 %v2300
        %v2302 = vlaneseq
        %v2303 = vshrl.u32 %v2302, 7
        %v2304 = vsub.s32 %v2301, %v2303
        %v2305 = vrot.slane %v2291, %v2304
        %v2306 = vcombine.low %v2250, %v2266
        %v2307 = vcombine.high %v2250, %v2266
        %v2309 = vunpack.c.l.s4 1934713408
        %v2310 = vunpack.c.0.s8 %v2309
        %v2311 = vlaneseq
        %v2312 = vshrl.u32 %v2311, 7
        %v2313 = vsub.s32 %v2310, %v2312
        %v2314 = vrot.slane %v2306, %v2313
        %v2316 = vunpack.c.l.s4 1934713408
        %v2317 = vunpack.c.0.s8 %v2316
        %v2318 = vlaneseq
        %v2319 = vshrl.u32 %v2318, 7
        %v2320 = vsub.s32 %v2317, %v2319
        %v2321 = vrot.slane %v2307, %v2320
        %v2322 = vcombine.low %v2257, %v2273
        %v2323 = vcombine.high %v2257, %v2273
        %v2325 = vunpack.c.l.s4 1934713408
        %v2326 = vunpack.c.0.s8 %v2325
        %v2327 = vlaneseq
        %v2328 = vshrl.u32 %v2327, 7
        %v2329 = vsub.s32 %v2326, %v2328
        %v2330 = vrot.slane %v2322, %v2329
        %v2332 = vunpack.c.l.s4 1934713408
        %v2333 = vunpack.c.0.s8 %v2332
        %v2334 = vlaneseq
        %v2335 = vshrl.u32 %v2334, 7
        %v2336 = vsub.s32 %v2333, %v2335
        %v2337 = vrot.slane %v2323, %v2336
        %v2338 = vcombine.low %v2282, %v2298
        %v2339 = vcombine.high %v2282, %v2298
        %v2341 = vunpack.c.l.s4 1934713408
        %v2342 = vunpack.c.0.s8 %v2341
        %v2343 = vlaneseq
        %v2344 = vshrl.u32 %v2343, 7
        %v2345 = vsub.s32 %v2342, %v2344
        %v2346 = vrot.slane %v2338, %v2345
        %v2348 = vunpack.c.l.s4 1934713408
        %v2349 = vunpack.c.0.s8 %v2348
        %v2350 = vlaneseq
        %v2351 = vshrl.u32 %v2350, 7
        %v2352 = vsub.s32 %v2349, %v2351
        %v2353 = vrot.slane %v2339, %v2352
        %v2354 = vcombine.low %v2289, %v2305
        %v2355 = vcombine.high %v2289, %v2305
        %v2357 = vunpack.c.l.s4 1934713408
        %v2358 = vunpack.c.0.s8 %v2357
        %v2359 = vlaneseq
        %v2360 = vshrl.u32 %v2359, 7
        %v2361 = vsub.s32 %v2358, %v2360
        %v2362 = vrot.slane %v2354, %v2361
        %v2364 = vunpack.c.l.s4 1934713408
        %v2365 = vunpack.c.0.s8 %v2364
        %v2366 = vlaneseq
        %v2367 = vshrl.u32 %v2366, 7
        %v2368 = vsub.s32 %v2365, %v2367
        %v2369 = vrot.slane %v2355, %v2368
        %v2370 = vcombine.low %v2314, %v2346
        %v2371 = vcombine.high %v2314, %v2346
        %v2372 = vcombine.low %v2321, %v2353
        %v2373 = vcombine.high %v2321, %v2353
        %v2374 = vcombine.low %v2330, %v2362
        %v2375 = vcombine.high %v2330, %v2362
        %v2376 = vcombine.low %v2337, %v2369
        %v2377 = vcombine.high %v2337, %v2369
        %v2378 = vcombine.low %v1372, %v1542
        %v2379 = vcombine.high %v1372, %v1542
        %v2381 = vunpack.c.l.s4 1983009808
        %v2382 = vunpack.c.0.s8 %v2381
        %v2383 = vlaneseq
        %v2384 = vshrl.u32 %v2383, 7
        %v2385 = vsub.s32 %v2382, %v2384
        %v2386 = vrot.slane %v2378, %v2385
        %v2388 = vunpack.c.l.s4 1983009808
        %v2389 = vunpack.c.0.s8 %v2388
        %v2390 = vlaneseq
        %v2391 = vshrl.u32 %v2390, 7
        %v2392 = vsub.s32 %v2389, %v2391
        %v2393 = vrot.slane %v2379, %v2392
        %v2394 = vcombine.low %v1457, %v1627
        %v2395 = vcombine.high %v1457, %v1627
        %v2397 = vunpack.c.l.s4 1983009808
        %v2398 = vunpack.c.0.s8 %v2397
        %v2399 = vlaneseq
        %v2400 = vshrl.u32 %v2399, 7
        %v2401 = vsub.s32 %v2398, %v2400
        %v2402 = vrot.slane %v2394, %v2401
        %v2404 = vunpack.c.l.s4 1983009808
        %v2405 = vunpack.c.0.s8 %v2404
        %v2406 = vlaneseq
        %v2407 = vshrl.u32 %v2406, 7
        %v2408 = vsub.s32 %v2405, %v2407
        %v2409 = vrot.slane %v2395, %v2408
        %v2410 = vcombine.low %v1712, %v1882
        %v2411 = vcombine.high %v1712, %v1882
        %v2413 = vunpack.c.l.s4 1983009808
        %v2414 = vunpack.c.0.s8 %v2413
        %v2415 = vlaneseq
        %v2416 = vshrl.u32 %v2415, 7
        %v2417 = vsub.s32 %v2414, %v2416
        %v2418 = vrot.slane %v2410, %v2417
        %v2420 = vunpack.c.l.s4 1983009808
        %v2421 = vunpack.c.0.s8 %v2420
        %v2422 = vlaneseq
        %v2423 = vshrl.u32 %v2422, 7
        %v2424 = vsub.s32 %v2421, %v2423
        %v2425 = vrot.slane %v2411, %v2424
        %v2426 = vcombine.low %v1797, %v1967
        %v2427 = vcombine.high %v1797, %v1967
        %v2429 = vunpack.c.l.s4 1983009808
        %v2430 = vunpack.c.0.s8 %v2429
        %v2431 = vlaneseq
        %v2432 = vshrl.u32 %v2431, 7
        %v2433 = vsub.s32 %v2430, %v2432
        %v2434 = vrot.slane %v2426, %v2433
        %v2436 = vunpack.c.l.s4 1983009808
        %v2437 = vunpack.c.0.s8 %v2436
        %v2438 = vlaneseq
        %v2439 = vshrl.u32 %v2438, 7
        %v2440 = vsub.s32 %v2437, %v2439
        %v2441 = vrot.slane %v2427, %v2440
        %v2442 = vcombine.low %v2386, %v2402
        %v2443 = vcombine.high %v2386, %v2402
        %v2445 = vunpack.c.l.s4 1934713408
        %v2446 = vunpack.c.0.s8 %v2445
        %v2447 = vlaneseq
        %v2448 = vshrl.u32 %v2447, 7
        %v2449 = vsub.s32 %v2446, %v2448
        %v2450 = vrot.slane %v2442, %v2449
        %v2452 = vunpack.c.l.s4 1934713408
        %v2453 = vunpack.c.0.s8 %v2452
        %v2454 = vlaneseq
        %v2455 = vshrl.u32 %v2454, 7
        %v2456 = vsub.s32 %v2453, %v2455
        %v2457 = vrot.slane %v2443, %v2456
        %v2458 = vcombine.low %v2393, %v2409
        %v2459 = vcombine.high %v2393, %v2409
        %v2461 = vunpack.c.l.s4 1934713408
        %v2462 = vunpack.c.0.s8 %v2461
        %v2463 = vlaneseq
        %v2464 = vshrl.u32 %v2463, 7
        %v2465 = vsub.s32 %v2462, %v2464
        %v2466 = vrot.slane %v2458, %v2465
        %v2468 = vunpack.c.l.s4 1934713408
        %v2469 = vunpack.c.0.s8 %v2468
        %v2470 = vlaneseq
        %v2471 = vshrl.u32 %v2470, 7
        %v2472 = vsub.s32 %v2469, %v2471
        %v2473 = vrot.slane %v2459, %v2472
        %v2474 = vcombine.low %v2418, %v2434
        %v2475 = vcombine.high %v2418, %v2434
        %v2477 = vunpack.c.l.s4 1934713408
        %v2478 = vunpack.c.0.s8 %v2477
        %v2479 = vlaneseq
        %v2480 = vshrl.u32 %v2479, 7
        %v2481 = vsub.s32 %v2478, %v2480
        %v2482 = vrot.slane %v2474, %v2481
        %v2484 = vunpack.c.l.s4 1934713408
        %v2485 = vunpack.c.0.s8 %v2484
        %v2486 = vlaneseq
        %v2487 = vshrl.u32 %v2486, 7
        %v2488 = vsub.s32 %v2485, %v2487
        %v2489 = vrot.slane %v2475, %v2488
        %v2490 = vcombine.low %v2425, %v2441
        %v2491 = vcombine.high %v2425, %v2441
        %v2493 = vunpack.c.l.s4 1934713408
        %v2494 = vunpack.c.0.s8 %v2493
        %v2495 = vlaneseq
        %v2496 = vshrl.u32 %v2495, 7
        %v2497 = vsub.s32 %v2494, %v2496
        %v2498 = vrot.slane %v2490, %v2497
        %v2500 = vunpack.c.l.s4 1934713408
        %v2501 = vunpack.c.0.s8 %v2500
        %v2502 = vlaneseq
        %v2503 = vshrl.u32 %v2502, 7
        %v2504 = vsub.s32 %v2501, %v2503
        %v2505 = vrot.slane %v2491, %v2504
        %v2506 = vcombine.low %v2450, %v2482
        %v2507 = vcombine.high %v2450, %v2482
        %v2508 = vcombine.low %v2457, %v2489
        %v2509 = vcombine.high %v2457, %v2489
        %v2510 = vcombine.low %v2466, %v2498
        %v2511 = vcombine.high %v2466, %v2498
        %v2512 = vcombine.low %v2473, %v2505
        %v2513 = vcombine.high %v2473, %v2505
        %2515 = vrot.lane.b32.xlu0 %v2099, 8
        %v2516 = vpop.permute.xlu0 %2515
        %2519 = vrot.lane.b32.xlu0 %v2100, 16
        %v2520 = vpop.permute.xlu0 %2519
        %2523 = vrot.lane.b32.xlu0 %v2101, 24
        %v2524 = vpop.permute.xlu0 %2523
        %2527 = vrot.lane.b32.xlu0 %v2102, 32
        %v2528 = vpop.permute.xlu0 %2527
        %2531 = vrot.lane.b32.xlu0 %v2103, 40
        %v2532 = vpop.permute.xlu0 %2531
        %2535 = vrot.lane.b32.xlu0 %v2104, 48
        %v2536 = vpop.permute.xlu0 %2535
        %2539 = vrot.lane.b32.xlu0 %v2105, 56
        %v2540 = vpop.permute.xlu0 %2539
        %2543 = vrot.lane.b32.xlu0 %v2234, 64
        %v2544 = vpop.permute.xlu0 %2543
        %2547 = vrot.lane.b32.xlu0 %v2235, 72
        %v2548 = vpop.permute.xlu0 %2547
        %2551 = vrot.lane.b32.xlu0 %v2236, 80
        %v2552 = vpop.permute.xlu0 %2551
        %2555 = vrot.lane.b32.xlu0 %v2237, 88
        %v2556 = vpop.permute.xlu0 %2555
        %2559 = vrot.lane.b32.xlu0 %v2238, 96
        %v2560 = vpop.permute.xlu0 %2559
        %2563 = vrot.lane.b32.xlu0 %v2239, 104
        %v2564 = vpop.permute.xlu0 %2563
        %2567 = vrot.lane.b32.xlu0 %v2240, 112
        %v2568 = vpop.permute.xlu0 %2567
        %2571 = vrot.lane.b32.xlu0 %v2241, 120
        %v2572 = vpop.permute.xlu0 %2571
        %2575 = vrot.lane.b32.xlu0 %v2371, 8
        %v2576 = vpop.permute.xlu0 %2575
        %2579 = vrot.lane.b32.xlu0 %v2372, 16
        %v2580 = vpop.permute.xlu0 %2579
        %2583 = vrot.lane.b32.xlu0 %v2373, 24
        %v2584 = vpop.permute.xlu0 %2583
        %2587 = vrot.lane.b32.xlu0 %v2374, 32
        %v2588 = vpop.permute.xlu0 %2587
        %2591 = vrot.lane.b32.xlu0 %v2375, 40
        %v2592 = vpop.permute.xlu0 %2591
        %2595 = vrot.lane.b32.xlu0 %v2376, 48
        %v2596 = vpop.permute.xlu0 %2595
        %2599 = vrot.lane.b32.xlu0 %v2377, 56
        %v2600 = vpop.permute.xlu0 %2599
        %2603 = vrot.lane.b32.xlu0 %v2506, 64
        %v2604 = vpop.permute.xlu0 %2603
        %2607 = vrot.lane.b32.xlu0 %v2507, 72
        %v2608 = vpop.permute.xlu0 %2607
        %2611 = vrot.lane.b32.xlu0 %v2508, 80
        %v2612 = vpop.permute.xlu0 %2611
        %2615 = vrot.lane.b32.xlu0 %v2509, 88
        %v2616 = vpop.permute.xlu0 %2615
        %2619 = vrot.lane.b32.xlu0 %v2510, 96
        %v2620 = vpop.permute.xlu0 %2619
        %2623 = vrot.lane.b32.xlu0 %v2511, 104
        %v2624 = vpop.permute.xlu0 %2623
        %2627 = vrot.lane.b32.xlu0 %v2512, 112
        %v2628 = vpop.permute.xlu0 %2627
        %2631 = vrot.lane.b32.xlu0 %v2513, 120
        %v2632 = vpop.permute.xlu0 %2631
        %v2634 = vsel %vm861, %v2098, %v2516
        %v2635 = vsel %vm895, %v2634, %v2520
        %v2636 = vsel %vm929, %v2635, %v2524
        %v2637 = vsel %vm963, %v2636, %v2528
        %vm2638 = vcmask 326656
        %v2639 = vsel %vm2638, %v2637, %v2532
        %vm2640 = vcmask 392192
        %v2641 = vsel %vm2640, %v2639, %v2536
        %vm2642 = vcmask 457728
        %v2643 = vsel %vm2642, %v2641, %v2540
        %vm2644 = vcmask 523264
        %v2645 = vsel %vm2644, %v2643, %v2544
        %vm2646 = vcmask 588800
        %v2647 = vsel %vm2646, %v2645, %v2548
        %vm2648 = vcmask 654336
        %v2649 = vsel %vm2648, %v2647, %v2552
        %vm2650 = vcmask 719872
        %v2651 = vsel %vm2650, %v2649, %v2556
        %vm2652 = vcmask 785408
        %v2653 = vsel %vm2652, %v2651, %v2560
        %vm2654 = vcmask 850944
        %v2655 = vsel %vm2654, %v2653, %v2564
        %vm2656 = vcmask 916480
        %v2657 = vsel %vm2656, %v2655, %v2568
        %vm2658 = vcmask 982016
        %v2659 = vsel %vm2658, %v2657, %v2572
        %v2660 = vsel %vm861, %v2370, %v2576
        %v2661 = vsel %vm895, %v2660, %v2580
        %v2662 = vsel %vm929, %v2661, %v2584
        %v2663 = vsel %vm963, %v2662, %v2588
        %v2664 = vsel %vm2638, %v2663, %v2592
        %v2665 = vsel %vm2640, %v2664, %v2596
        %v2666 = vsel %vm2642, %v2665, %v2600
        %v2667 = vsel %vm2644, %v2666, %v2604
        %v2668 = vsel %vm2646, %v2667, %v2608
        %v2669 = vsel %vm2648, %v2668, %v2612
        %v2670 = vsel %vm2650, %v2669, %v2616
        %v2671 = vsel %vm2652, %v2670, %v2620
        %v2672 = vsel %vm2654, %v2671, %v2624
        %v2673 = vsel %vm2656, %v2672, %v2628
        %v2674 = vsel %vm2658, %v2673, %v2632
        %2675 = vst [vmem:[%s231] sm:$0xff] %v2659
        %2676 = vst [vmem:[%s231 + $0x8] sm:$0xff] %v2674
        %s2677 = sand.u32 %s151, 1
        %s2678 = scalar_lea.sflag [#allocation3], %s2677
        %s2679 = sand.u32 %s151, 1
        %s2680 = smul.addr %s2679, 16
        %s2681 = scalar_lea.vmem [#allocation2], %s2680
        // Predicated region
        $region41: #{tpu_custom_call.1} parent=39 // pred_check
          %p2682 = pneg %p161
        $region42: #{tpu_custom_call.1} parent=39 // pred_check_branch
          %2684 = sbr.rel (%p2682) target = $region44
        $region43: #{tpu_custom_call.1} parent=39 // pred_region
          %s2686 = ssub.s32 256, 256
          %2687 = vsyncadd %s2678, %s2686
          %s2688 = smul.addr %s24, 2
          %s2689 = smul.addr %s23, 4
          %s2690 = sadd.s32 %s2688, %s2689
          %s2691 = smul.addr %s2690, 128
          %s2692 = scalar_lea.hbm %s5, %s2691
          %s2694 = sshll.u32 %s2681, 4
          %s2695 = int_to_ptr.vmem [resolvable:$true] %s2694
          %2697 = dma.vmem_to_hbm [thread:$0]  %s2695, 256, %s2692, %s2678
        $region44: #{tpu_custom_call.1} parent=39 // pred_fallthru
          _
      $region40: #{tpu_custom_call.1} parent=5 // pred_fallthru
        _
      %p2698 = scmp.le.s32.totalorder 2, %s14
      // Predicated region
      $region45: #{tpu_custom_call.1} parent=5 // pred_check
        %p2699 = pneg %p2698
      $region46: #{tpu_custom_call.1} parent=5 // pred_check_branch
        %2701 = sbr.rel (%p2699) target = $region48
      $region47: #{tpu_custom_call.1} parent=5 // pred_region
        %s2702 = ssub.s32 %s14, 2
        // Predicated region
        $region49: #{tpu_custom_call.1} parent=47 // pred_check
          %p2703 = pneg %p167
        $region50: #{tpu_custom_call.1} parent=47 // pred_check_branch
          %2705 = sbr.rel (%p2703) target = $region52
        $region51: #{tpu_custom_call.1} parent=47 // pred_region
          %s2706 = sand.u32 %s152, 1
          %s2707 = scalar_lea.sflag [#allocation3], %s2706
          %s2708 = sand.u32 %s152, 1
          %s2709 = smul.addr %s2708, 16
          %s2710 = scalar_lea.vmem [#allocation2], %s2709
          %2711 = dma.done %s2707, 256
        $region52: #{tpu_custom_call.1} parent=47 // pred_fallthru
          _
      $region48: #{tpu_custom_call.1} parent=5 // pred_fallthru
        _
    $region6: #{tpu_custom_call.1} parent=1 // loop_footer
      %s18 = sadd.s32 1, %s14
    $region7: #{tpu_custom_call.1} parent=1 // loop_footer_branch
      %13 = sbr.rel target = $region3
    $region8: #{tpu_custom_call.1} parent=1 // loop_exit
      _
    %2712 = vsyncpa [#allocation3], 1
    %s2713 = scalar_lea.sflag [#allocation3], 1
    %2714 = vsyncpa %s2713, 1

</llo_original>
